<compile_context>
chip_gen: v7x
topology: tpu7x:2x2x1
jax: 0.10.0
libtpu: 0.0.40
codegen_flags: <defaults>
</compile_context>

<pallas_src>
import numpy as np
import jax
import jax.numpy as jnp
from jax import lax
from jax.experimental import pallas as pl
from jax.experimental.pallas import tpu as pltpu

N_QUBITS = 4                    # CartPole circuit
N_LAYERS = 2
N_ACTIONS = 2                   # measure_cartpole returns 2 expvals
DIM = 2 ** N_QUBITS             # 16 amplitudes
SUB = 8                         # sublane rows  (batch dimension, part 1)
KGRP = 8                        # 16-lane basis groups per row (batch dimension, part 2)
LANES = KGRP * DIM              # 128 lanes -> one full f32 vreg row
BLOCK_BATCH = SUB * KGRP        # 64 observations per grid step
GROWS = N_LAYERS * N_QUBITS * 4  # 32 coefficient rows (alpha_r, alpha_i, beta_r, beta_i per gate)


def _bit(b, wire):
    # PennyLane: wire 0 is the most-significant bit of the computational-basis index.
    return (b >> (N_QUBITS - 1 - wire)) & 1


def _build_meas_matrix():
    """Block-diagonal (128, 16) matrix: col 2k+a = <Z..Z> sign of action a for lane-group k."""
    M = np.zeros((LANES, KGRP * N_ACTIONS), np.float32)
    for k in range(KGRP):
        for b in range(DIM):
            s0 = (1.0 - 2.0 * _bit(b, 0)) * (1.0 - 2.0 * _bit(b, 1))
            s1 = (1.0 - 2.0 * _bit(b, 2)) * (1.0 - 2.0 * _bit(b, 3))
            M[DIM * k + b, N_ACTIONS * k + 0] = s0
            M[DIM * k + b, N_ACTIONS * k + 1] = s1
    return M


def _build_flip_matrices():
    """Fallback path only: block-diagonal (4, 128, 128) bit-flip permutations."""
    F = np.zeros((N_QUBITS, LANES, LANES), np.float32)
    for w in range(N_QUBITS):
        m = 1 << (N_QUBITS - 1 - w)
        for k in range(KGRP):
            for b in range(DIM):
                F[w, DIM * k + b, DIM * k + (b ^ m)] = 1.0
    return F


_MEAS = _build_meas_matrix()
_FLIP = _build_flip_matrices()


# ----------------------------------------------------------------------------------
# Roll-capability probe: decides how the per-wire bit-flip permutation is realized.
# ----------------------------------------------------------------------------------
_FLIP_STRATEGY = None


def _flip_strategy():
    """Returns (use_roll, roll_gives_minus).

    roll_gives_minus == True  <=>  pltpu.roll(x, s, axis=1)[i] == x[(i - s) % n]
    (numpy/jnp convention).  If roll cannot be lowered or has unexpected semantics we
    fall back to one fused MXU permutation matmul per composed gate (proven path).
    """
    global _FLIP_STRATEGY
    if _FLIP_STRATEGY is not None:
        return _FLIP_STRATEGY

    def probe_kernel(x_ref, o_ref):
        o_ref[...] = pltpu.roll(x_ref[...], 1, axis=1)

    try:
        x = jnp.tile(jnp.arange(LANES, dtype=jnp.float32)[None, :], (SUB, 1))
        y = pl.pallas_call(
            probe_kernel,
            out_shape=jax.ShapeDtypeStruct((SUB, LANES), jnp.float32),
        )(x)
        y00 = float(jax.block_until_ready(y)[0, 0])
        if y00 == float(LANES - 1):
            _FLIP_STRATEGY = (True, True)
        elif y00 == 1.0:
            _FLIP_STRATEGY = (True, False)
        else:
            _FLIP_STRATEGY = (False, True)
    except Exception:
        _FLIP_STRATEGY = (False, True)
    return _FLIP_STRATEGY


# ----------------------------------------------------------------------------------
# Kernel
# ----------------------------------------------------------------------------------
def _make_kernel(use_roll, roll_gives_minus):
    def _body(gates_ref, meas_ref, wout_ref, out_ref, flip_ref):
        lane = lax.broadcasted_iota(jnp.int32, (SUB, LANES), 1)
        b = lane & (DIM - 1)                     # basis index within each 16-lane group

        bits, neg_g = [], []
        for w in range(N_QUBITS):
            m = 1 << (N_QUBITS - 1 - w)
            bit = (b & m) != 0
            bits.append(bit)
            # -g : +1 where the wire bit is 0, -1 where it is 1
            neg_g.append(jnp.where(bit, -1.0, 1.0).astype(jnp.float32))

        cz_sign = jnp.ones((SUB, LANES), jnp.float32)
        for w in range(N_QUBITS):
            both = jnp.logical_and(bits[w], bits[(w + 1) % N_QUBITS])
            cz_sign = jnp.where(both, -cz_sign, cz_sign)

        # |0...0> for every batch element (one per 16-lane group per sublane)
        re = jnp.where(b == 0, 1.0, 0.0).astype(jnp.float32)
        im = jnp.zeros((SUB, LANES), jnp.float32)

        def flipped_pair(vre, vim, w):
            m = 1 << (N_QUBITS - 1 - w)
            if use_roll:
                def fl(v):
                    r_a = pltpu.roll(v, m, axis=1)
                    r_b = pltpu.roll(v, LANES - m, axis=1)
                    v_minus, v_plus = (r_a, r_b) if roll_gives_minus else (r_b, r_a)
                    # bit set: partner at lane-m ; bit clear: partner at lane+m.
                    # Selected lanes never cross a 16-lane (batch) group boundary.
                    return jnp.where(bits[w], v_minus, v_plus)
                return fl(vre), fl(vim)
            # Fallback: one fused MXU matmul per composed gate (re/im stacked).
            stacked = jnp.concatenate([vre, vim], axis=0)          # (2*SUB, LANES)
            ff = jnp.dot(stacked, flip_ref[w], preferred_element_type=jnp.float32)
            return ff[:SUB, :], ff[SUB:, :]

        for l in range(N_LAYERS):
            for w in range(N_QUBITS):
                gi = (l * N_QUBITS + w) * 4
                ar = gates_ref[gi + 0]           # Re(alpha), per-batch, lane-broadcast
                ai = gates_ref[gi + 1]           # Im(alpha)
                br = gates_ref[gi + 2]           # Re(beta)
                bi = gates_ref[gi + 3]           # Im(beta)
                re_f, im_f = flipped_pair(re, im, w)
                a_im = neg_g[w] * ai
                b_re = neg_g[w] * br
                re, im = (ar * re - a_im * im + b_re * re_f - bi * im_f,
                          ar * im + a_im * re + b_re * im_f + bi * re_f)
            re = re * cz_sign
            im = im * cz_sign

        probs = re * re + im * im                                   # (8, 128)
        expv = jnp.dot(probs, meas_ref[...],
                       preferred_element_type=jnp.float32)          # (8, 16): col = 2k + a
        col = lax.broadcasted_iota(jnp.int32, (SUB, KGRP * N_ACTIONS), 1)
        w_row = jnp.where((col & 1) == 0, wout_ref[0], wout_ref[1])
        out_ref[...] = (1.0 + expv) * 0.5 * w_row

    if use_roll:
        def kernel(gates_ref, meas_ref, wout_ref, out_ref):
            _body(gates_ref, meas_ref, wout_ref, out_ref, None)
    else:
        def kernel(gates_ref, meas_ref, wout_ref, flip_ref, out_ref):
            _body(gates_ref, meas_ref, wout_ref, out_ref, flip_ref)
    return kernel


# ----------------------------------------------------------------------------------
# Wrapper (glue: angle preprocessing + SU(2) composition + layout plumbing)
# ----------------------------------------------------------------------------------
def build_forward():
    use_roll, roll_gives_minus = _flip_strategy()
    kernel = _make_kernel(use_roll, roll_gives_minus)
    meas_const = jnp.asarray(_MEAS)                          # (128, 16)
    flip_const = None if use_roll else jnp.asarray(_FLIP)    # (4, 128, 128) fallback only

    @jax.jit
    def forward(x, w_input, y_weights, z_weights, w_output):
        squeeze = x.ndim == 1
        xb = x[None, :] if squeeze else x
        n = xb.shape[0]
        nb = -(-n // BLOCK_BATCH)                            # static ceil-div
        npad = nb * BLOCK_BATCH
        xp = jnp.zeros((npad, N_QUBITS), jnp.float32).at[:n].set(xb.astype(jnp.float32))

        # environment == 0  =>  RX(atan(x) * w_input)
        ha = 0.5 * jnp.arctan(xp) * w_input                  # (npad, NQ) half encode angle
        ca, sa = jnp.cos(ha)[:, None, :], jnp.sin(ha)[:, None, :]                 # (npad,1,NQ)
        cy, sy = jnp.cos(0.5 * y_weights)[None], jnp.sin(0.5 * y_weights)[None]   # (1,L,NQ)
        cz, sz = jnp.cos(0.5 * z_weights)[None], jnp.sin(0.5 * z_weights)[None]

        # Composed single-qubit gate U = RZ(z) @ RY(y) @ RX(a) = [[a, b], [-conj(b), conj(a)]]
        ar = cz * cy * ca + sz * sy * sa
        ai = cz * sy * sa - sz * cy * ca
        br = -(cz * sy * ca + sz * cy * sa)
        bi = sz * sy * ca - cz * cy * sa                     # each (npad, L, NQ)

        coeff = jnp.stack([ar, ai, br, bi], axis=-1)         # (npad, L, NQ, 4)
        coeff = coeff.reshape(nb, SUB, KGRP, N_LAYERS, N_QUBITS, 4)
        coeff = jnp.transpose(coeff, (0, 3, 4, 5, 1, 2))     # (nb, L, NQ, 4, SUB, KGRP)
        coeff = coeff.reshape(nb, GROWS, SUB, KGRP)
        gates = jnp.broadcast_to(coeff[..., None], (nb, GROWS, SUB, KGRP, DIM))
        gates = gates.reshape(nb * GROWS, SUB, LANES).astype(jnp.float32)

        in_specs = [
            pl.BlockSpec((GROWS, SUB, LANES), lambda i: (i, 0, 0)),
            pl.BlockSpec((LANES, KGRP * N_ACTIONS), lambda i: (0, 0)),
            pl.BlockSpec(memory_space=pltpu.MemorySpace.SMEM),
        ]
        args = [gates, meas_const, w_output.astype(jnp.float32)]
        if not use_roll:
            in_specs.append(pl.BlockSpec((N_QUBITS, LANES, LANES), lambda i: (0, 0, 0)))
            args.append(flip_const)

        out = pl.pallas_call(
            kernel,
            out_shape=jax.ShapeDtypeStruct((nb * SUB, KGRP * N_ACTIONS), jnp.float32),
            grid=(nb,),
            in_specs=in_specs,
            out_specs=pl.BlockSpec((SUB, KGRP * N_ACTIONS), lambda i: (i, 0)),
            compiler_params=pltpu.CompilerParams(dimension_semantics=("parallel",)),
        )(*args)

        out = out.reshape(nb, SUB, KGRP, N_ACTIONS).reshape(npad, N_ACTIONS)[:n]
        return out[0] if squeeze else out

    return forward


# ----------------------------------------------------------------------------------
# Independent numpy/complex statevector reference (PennyLane semantics, environment=0)
# ----------------------------------------------------------------------------------
def reference_forward(x, w_input, y_weights, z_weights, w_output):
    ang = np.arctan(np.asarray(x, np.float64)) * np.asarray(w_input, np.float64)
    yw = np.asarray(y_weights, np.float64)
    zw = np.asarray(z_weights, np.float64)

    def RX(t):
        c, s = np.cos(t / 2), np.sin(t / 2)
        return np.array([[c, -1j * s], [-1j * s, c]])

    def RY(t):
        c, s = np.cos(t / 2), np.sin(t / 2)
        return np.array([[c, -s], [s, c]], dtype=complex)

    def RZ(t):
        return np.diag([np.exp(-1j * t / 2), np.exp(1j * t / 2)])

    def apply_1q(psi, G, w):
        U = np.eye(1, dtype=complex)
        for q in range(N_QUBITS):
            U = np.kron(U, G if q == w else np.eye(2))
        return U @ psi

    cz_diag = np.ones(DIM, complex)
    for w in range(N_QUBITS):
        wn = (w + 1) % N_QUBITS
        for b in range(DIM):
            if _bit(b, w) == 1 and _bit(b, wn) == 1:
                cz_diag[b] *= -1.0

    psi = np.zeros(DIM, complex)
    psi[0] = 1.0
    for l in range(N_LAYERS):
        for w in range(N_QUBITS):
            psi = apply_1q(psi, RX(ang[w]), w)
        for w in range(N_QUBITS):
            psi = apply_1q(psi, RY(yw[l, w]), w)
        for w in range(N_QUBITS):
            psi = apply_1q(psi, RZ(zw[l, w]), w)
        psi = cz_diag * psi

    probs = np.abs(psi) ** 2
    m1 = np.array([(1 - 2 * _bit(b, 0)) * (1 - 2 * _bit(b, 1)) for b in range(DIM)], np.float64)
    m2 = np.array([(1 - 2 * _bit(b, 2)) * (1 - 2 * _bit(b, 3)) for b in range(DIM)], np.float64)
    expv = np.array([probs @ m1, probs @ m2])
    return (1.0 + expv) / 2.0 * np.asarray(w_output, np.float64)


if __name__ == "__main__":
    key = jax.random.PRNGKey(0)
    k_x, k_wi, k_wo, k_y, k_z = jax.random.split(key, 5)

    BATCH = 128                       # 2 grid blocks of 64 -> exercises the parallel batch grid
    x_batch = jax.random.normal(k_x, (BATCH, N_QUBITS), jnp.float32)        # observations
    w_input = jax.random.normal(k_wi, (N_QUBITS,), jnp.float32)             # normal(mean=0)
    w_output = 90.0 + jax.random.normal(k_wo, (N_ACTIONS,), jnp.float32)    # normal(mean=90)
    y_weights = jax.random.uniform(k_y, (N_LAYERS, N_QUBITS), jnp.float32,
                                   0.0, 2.0 * np.pi)
    z_weights = jax.random.uniform(k_z, (N_LAYERS, N_QUBITS), jnp.float32,
                                   0.0, 2.0 * np.pi)

    fwd = build_forward()
    out = jax.block_until_ready(fwd(x_batch, w_input, y_weights, z_weights, w_output))

    xs = np.asarray(x_batch, np.float64)
    ref = np.stack([
        reference_forward(xs[i], np.array(w_input), np.array(y_weights),
                          np.array(z_weights), np.array(w_output))
        for i in range(BATCH)
    ])
    assert np.allclose(np.asarray(out, np.float64), ref, rtol=1e-4, atol=1e-3), (out[:4], ref[:4])

    # Single-observation path (original module interface: inputs of shape (n_qubits,)).
    out1 = jax.block_until_ready(fwd(x_batch[0], w_input, y_weights, z_weights, w_output))
    assert np.allclose(np.asarray(out1, np.float64), ref[0], rtol=1e-4, atol=1e-3), (out1, ref[0])

    print("KERNEL_OK")
</pallas_src>

<mosaic_0001>
module attributes {stable_mosaic.version = 11 : i64} {
  func.func @probe_kernel(%arg0: memref<8x128xf32, #tpu.memory_space<vmem>>, %arg1: memref<8x128xf32, #tpu.memory_space<vmem>>) attributes {dimension_semantics = [], scalar_prefetch = 0 : i64, scratch_operands = 0 : i64, tpu.core_type = #tpu.core_type<tc>} {
    %c0 = arith.constant 0 : index
    %c0_0 = arith.constant 0 : index
    %0 = vector.load %arg0[%c0, %c0_0] : memref<8x128xf32, #tpu.memory_space<vmem>>, vector<8x128xf32>
    %c1_i32 = arith.constant 1 : i32
    %1 = tpu.dynamic_rotate %0 by %c1_i32 dim 1 : vector<8x128xf32>, i32 -> vector<8x128xf32>
    %c0_1 = arith.constant 0 : index
    %c0_2 = arith.constant 0 : index
    %2 = vector.load %arg1[%c0_1, %c0_2] : memref<8x128xf32, #tpu.memory_space<vmem>>, vector<8x128xf32>
    tpu.vector_store %arg1[%c0_1, %c0_2], %1 {strides = array<i32>} : memref<8x128xf32, #tpu.memory_space<vmem>>, vector<8x128xf32>,
    return
  }
}

module attributes {stable_mosaic.version = 11 : i64} {
  func.func @kernel(%arg0: i32, %arg1: memref<32x8x128xf32, #tpu.memory_space<vmem>>, %arg2: memref<128x16xf32, #tpu.memory_space<vmem>>, %arg3: memref<2xf32, #tpu.memory_space<smem>>, %arg4: memref<4x128x128xf32, #tpu.memory_space<vmem>>, %arg5: memref<8x16xf32, #tpu.memory_space<vmem>>) attributes {dimension_semantics = [#tpu.dimension_semantics<parallel>], iteration_bounds = array<i64: 2>, scalar_prefetch = 0 : i64, scratch_operands = 0 : i64, tpu.core_type = #tpu.core_type<tc>, window_params = [{transform_indices = @transform_0, window_bounds = array<i64: 32, 8, 128>}, {pipeline_mode = #tpu.pipeline_mode<synchronous>, transform_indices = @transform_1, window_bounds = array<i64: 128, 16>}, {transform_indices = @transform_2, window_bounds = array<i64: 2>}, {pipeline_mode = #tpu.pipeline_mode<synchronous>, transform_indices = @transform_3, window_bounds = array<i64: 4, 128, 128>}, {transform_indices = @transform_4, window_bounds = array<i64: 8, 16>}]} {
    %0 = tpu.iota {dimensions = array<i32: 1>} : vector<8x128xi32>
    %c15_i32 = arith.constant 15 : i32
    %1 = vector.broadcast %c15_i32 : i32 to vector<8x128xi32>
    %2 = arith.andi %0, %1 : vector<8x128xi32>
    %c8_i32 = arith.constant 8 : i32
    %3 = vector.broadcast %c8_i32 : i32 to vector<8x128xi32>
    %4 = arith.andi %2, %3 : vector<8x128xi32>
    %c0_i32 = arith.constant 0 : i32
    %5 = vector.broadcast %c0_i32 : i32 to vector<8x128xi32>
    %6 = arith.cmpi ne, %4, %5 : vector<8x128xi32>
    %cst = arith.constant -1.000000e+00 : f32
    %cst_0 = arith.constant 1.000000e+00 : f32
    %7 = vector.broadcast %cst : f32 to vector<8x128xf32>
    %8 = vector.broadcast %cst_0 : f32 to vector<8x128xf32>
    %9 = arith.select %6, %7, %8 : vector<8x128xi1>, vector<8x128xf32>
    %c4_i32 = arith.constant 4 : i32
    %10 = vector.broadcast %c4_i32 : i32 to vector<8x128xi32>
    %11 = arith.andi %2, %10 : vector<8x128xi32>
    %c0_i32_1 = arith.constant 0 : i32
    %12 = vector.broadcast %c0_i32_1 : i32 to vector<8x128xi32>
    %13 = arith.cmpi ne, %11, %12 : vector<8x128xi32>
    %cst_2 = arith.constant -1.000000e+00 : f32
    %cst_3 = arith.constant 1.000000e+00 : f32
    %14 = vector.broadcast %cst_2 : f32 to vector<8x128xf32>
    %15 = vector.broadcast %cst_3 : f32 to vector<8x128xf32>
    %16 = arith.select %13, %14, %15 : vector<8x128xi1>, vector<8x128xf32>
    %c2_i32 = arith.constant 2 : i32
    %17 = vector.broadcast %c2_i32 : i32 to vector<8x128xi32>
    %18 = arith.andi %2, %17 : vector<8x128xi32>
    %c0_i32_4 = arith.constant 0 : i32
    %19 = vector.broadcast %c0_i32_4 : i32 to vector<8x128xi32>
    %20 = arith.cmpi ne, %18, %19 : vector<8x128xi32>
    %cst_5 = arith.constant -1.000000e+00 : f32
    %cst_6 = arith.constant 1.000000e+00 : f32
    %21 = vector.broadcast %cst_5 : f32 to vector<8x128xf32>
    %22 = vector.broadcast %cst_6 : f32 to vector<8x128xf32>
    %23 = arith.select %20, %21, %22 : vector<8x128xi1>, vector<8x128xf32>
    %c1_i32 = arith.constant 1 : i32
    %24 = vector.broadcast %c1_i32 : i32 to vector<8x128xi32>
    %25 = arith.andi %2, %24 : vector<8x128xi32>
    %c0_i32_7 = arith.constant 0 : i32
    %26 = vector.broadcast %c0_i32_7 : i32 to vector<8x128xi32>
    %27 = arith.cmpi ne, %25, %26 : vector<8x128xi32>
    %cst_8 = arith.constant -1.000000e+00 : f32
    %cst_9 = arith.constant 1.000000e+00 : f32
    %28 = vector.broadcast %cst_8 : f32 to vector<8x128xf32>
    %29 = vector.broadcast %cst_9 : f32 to vector<8x128xf32>
    %30 = arith.select %27, %28, %29 : vector<8x128xi1>, vector<8x128xf32>
    %cst_10 = arith.constant 1.000000e+00 : f32
    %31 = vector.broadcast %cst_10 : f32 to vector<8x128xf32>
    %32 = arith.andi %6, %13 : vector<8x128xi1>
    %cst_11 = arith.constant 0.000000e+00 : f32
    %33 = vector.broadcast %cst_11 : f32 to vector<8x128xf32>
    %34 = arith.subf %33, %31 : vector<8x128xf32>
    %35 = arith.select %32, %34, %31 : vector<8x128xi1>, vector<8x128xf32>
    %36 = arith.andi %13, %20 : vector<8x128xi1>
    %cst_12 = arith.constant 0.000000e+00 : f32
    %37 = vector.broadcast %cst_12 : f32 to vector<8x128xf32>
    %38 = arith.subf %37, %35 : vector<8x128xf32>
    %39 = arith.select %36, %38, %35 : vector<8x128xi1>, vector<8x128xf32>
    %40 = arith.andi %20, %27 : vector<8x128xi1>
    %cst_13 = arith.constant 0.000000e+00 : f32
    %41 = vector.broadcast %cst_13 : f32 to vector<8x128xf32>
    %42 = arith.subf %41, %39 : vector<8x128xf32>
    %43 = arith.select %40, %42, %39 : vector<8x128xi1>, vector<8x128xf32>
    %44 = arith.andi %27, %6 : vector<8x128xi1>
    %cst_14 = arith.constant 0.000000e+00 : f32
    %45 = vector.broadcast %cst_14 : f32 to vector<8x128xf32>
    %46 = arith.subf %45, %43 : vector<8x128xf32>
    %47 = arith.select %44, %46, %43 : vector<8x128xi1>, vector<8x128xf32>
    %c0_i32_15 = arith.constant 0 : i32
    %48 = vector.broadcast %c0_i32_15 : i32 to vector<8x128xi32>
    %49 = arith.cmpi eq, %2, %48 : vector<8x128xi32>
    %cst_16 = arith.constant 1.000000e+00 : f32
    %cst_17 = arith.constant 0.000000e+00 : f32
    %50 = vector.broadcast %cst_16 : f32 to vector<8x128xf32>
    %51 = vector.broadcast %cst_17 : f32 to vector<8x128xf32>
    %52 = arith.select %49, %50, %51 : vector<8x128xi1>, vector<8x128xf32>
    %cst_18 = arith.constant 0.000000e+00 : f32
    %53 = vector.broadcast %cst_18 : f32 to vector<8x128xf32>
    %c0 = arith.constant 0 : index
    %c0_19 = arith.constant 0 : index
    %c0_20 = arith.constant 0 : index
    %54 = vector.load %arg1[%c0, %c0_19, %c0_20] : memref<32x8x128xf32, #tpu.memory_space<vmem>>, vector<1x8x128xf32>
    %55 = vector.shape_cast %54 : vector<1x8x128xf32> to vector<8x128xf32>
    %c1 = arith.constant 1 : index
    %c0_21 = arith.constant 0 : index
    %c0_22 = arith.constant 0 : index
    %56 = vector.load %arg1[%c1, %c0_21, %c0_22] : memref<32x8x128xf32, #tpu.memory_space<vmem>>, vector<1x8x128xf32>
    %57 = vector.shape_cast %56 : vector<1x8x128xf32> to vector<8x128xf32>
    %c2 = arith.constant 2 : index
    %c0_23 = arith.constant 0 : index
    %c0_24 = arith.constant 0 : index
    %58 = vector.load %arg1[%c2, %c0_23, %c0_24] : memref<32x8x128xf32, #tpu.memory_space<vmem>>, vector<1x8x128xf32>
    %59 = vector.shape_cast %58 : vector<1x8x128xf32> to vector<8x128xf32>
    %c3 = arith.constant 3 : index
    %c0_25 = arith.constant 0 : index
    %c0_26 = arith.constant 0 : index
    %60 = vector.load %arg1[%c3, %c0_25, %c0_26] : memref<32x8x128xf32, #tpu.memory_space<vmem>>, vector<1x8x128xf32>
    %61 = vector.shape_cast %60 : vector<1x8x128xf32> to vector<8x128xf32>
    %62 = tpu.concatenate %52, %53 in 0 : vector<8x128xf32>, vector<8x128xf32> -> vector<16x128xf32>
    %c0_27 = arith.constant 0 : index
    %c0_28 = arith.constant 0 : index
    %c0_29 = arith.constant 0 : index
    %63 = vector.load %arg4[%c0_27, %c0_28, %c0_29] : memref<4x128x128xf32, #tpu.memory_space<vmem>>, vector<1x128x128xf32>
    %64 = vector.shape_cast %63 : vector<1x128x128xf32> to vector<128x128xf32>
    %cst_30 = arith.constant dense<0.000000e+00> : vector<16x128xf32>
    %65 = tpu.matmul %62, %64, %cst_30 {dimension_numbers = #tpu.dot_dimension_numbers<[1], [0], [0], [1], [0, 0, 1, 1], [], []>} : vector<16x128xf32>, vector<128x128xf32>, vector<16x128xf32> -> vector<16x128xf32>
    %66 = vector.extract_strided_slice %65 {offsets = [0, 0], sizes = [8, 128], strides = [1, 1]} : vector<16x128xf32> to vector<8x128xf32>
    %67 = vector.extract_strided_slice %65 {offsets = [8, 0], sizes = [8, 128], strides = [1, 1]} : vector<16x128xf32> to vector<8x128xf32>
    %68 = arith.mulf %9, %57 : vector<8x128xf32>
    %69 = arith.mulf %9, %59 : vector<8x128xf32>
    %70 = arith.mulf %55, %52 : vector<8x128xf32>
    %71 = arith.mulf %68, %53 : vector<8x128xf32>
    %72 = arith.subf %70, %71 : vector<8x128xf32>
    %73 = arith.mulf %69, %66 : vector<8x128xf32>
    %74 = arith.addf %72, %73 : vector<8x128xf32>
    %75 = arith.mulf %61, %67 : vector<8x128xf32>
    %76 = arith.subf %74, %75 : vector<8x128xf32>
    %77 = arith.mulf %55, %53 : vector<8x128xf32>
    %78 = arith.mulf %68, %52 : vector<8x128xf32>
    %79 = arith.addf %77, %78 : vector<8x128xf32>
    %80 = arith.mulf %69, %67 : vector<8x128xf32>
    %81 = arith.addf %79, %80 : vector<8x128xf32>
    %82 = arith.mulf %61, %66 : vector<8x128xf32>
    %83 = arith.addf %81, %82 : vector<8x128xf32>
    %c4 = arith.constant 4 : index
    %c0_31 = arith.constant 0 : index
    %c0_32 = arith.constant 0 : index
    %84 = vector.load %arg1[%c4, %c0_31, %c0_32] : memref<32x8x128xf32, #tpu.memory_space<vmem>>, vector<1x8x128xf32>
    %85 = vector.shape_cast %84 : vector<1x8x128xf32> to vector<8x128xf32>
    %c5 = arith.constant 5 : index
    %c0_33 = arith.constant 0 : index
    %c0_34 = arith.constant 0 : index
    %86 = vector.load %arg1[%c5, %c0_33, %c0_34] : memref<32x8x128xf32, #tpu.memory_space<vmem>>, vector<1x8x128xf32>
    %87 = vector.shape_cast %86 : vector<1x8x128xf32> to vector<8x128xf32>
    %c6 = arith.constant 6 : index
    %c0_35 = arith.constant 0 : index
    %c0_36 = arith.constant 0 : index
    %88 = vector.load %arg1[%c6, %c0_35, %c0_36] : memref<32x8x128xf32, #tpu.memory_space<vmem>>, vector<1x8x128xf32>
    %89 = vector.shape_cast %88 : vector<1x8x128xf32> to vector<8x128xf32>
    %c7 = arith.constant 7 : index
    %c0_37 = arith.constant 0 : index
    %c0_38 = arith.constant 0 : index
    %90 = vector.load %arg1[%c7, %c0_37, %c0_38] : memref<32x8x128xf32, #tpu.memory_space<vmem>>, vector<1x8x128xf32>
    %91 = vector.shape_cast %90 : vector<1x8x128xf32> to vector<8x128xf32>
    %92 = tpu.concatenate %76, %83 in 0 : vector<8x128xf32>, vector<8x128xf32> -> vector<16x128xf32>
    %c1_39 = arith.constant 1 : index
    %c0_40 = arith.constant 0 : index
    %c0_41 = arith.constant 0 : index
    %93 = vector.load %arg4[%c1_39, %c0_40, %c0_41] : memref<4x128x128xf32, #tpu.memory_space<vmem>>, vector<1x128x128xf32>
    %94 = vector.shape_cast %93 : vector<1x128x128xf32> to vector<128x128xf32>
    %cst_42 = arith.constant dense<0.000000e+00> : vector<16x128xf32>
    %95 = tpu.matmul %92, %94, %cst_42 {dimension_numbers = #tpu.dot_dimension_numbers<[1], [0], [0], [1], [0, 0, 1, 1], [], []>} : vector<16x128xf32>, vector<128x128xf32>, vector<16x128xf32> -> vector<16x128xf32>
    %96 = vector.extract_strided_slice %95 {offsets = [0, 0], sizes = [8, 128], strides = [1, 1]} : vector<16x128xf32> to vector<8x128xf32>
    %97 = vector.extract_strided_slice %95 {offsets = [8, 0], sizes = [8, 128], strides = [1, 1]} : vector<16x128xf32> to vector<8x128xf32>
    %98 = arith.mulf %16, %87 : vector<8x128xf32>
    %99 = arith.mulf %16, %89 : vector<8x128xf32>
    %100 = arith.mulf %85, %76 : vector<8x128xf32>
    %101 = arith.mulf %98, %83 : vector<8x128xf32>
    %102 = arith.subf %100, %101 : vector<8x128xf32>
    %103 = arith.mulf %99, %96 : vector<8x128xf32>
    %104 = arith.addf %102, %103 : vector<8x128xf32>
    %105 = arith.mulf %91, %97 : vector<8x128xf32>
    %106 = arith.subf %104, %105 : vector<8x128xf32>
    %107 = arith.mulf %85, %83 : vector<8x128xf32>
    %108 = arith.mulf %98, %76 : vector<8x128xf32>
    %109 = arith.addf %107, %108 : vector<8x128xf32>
    %110 = arith.mulf %99, %97 : vector<8x128xf32>
    %111 = arith.addf %109, %110 : vector<8x128xf32>
    %112 = arith.mulf %91, %96 : vector<8x128xf32>
    %113 = arith.addf %111, %112 : vector<8x128xf32>
    %c8 = arith.constant 8 : index
    %c0_43 = arith.constant 0 : index
    %c0_44 = arith.constant 0 : index
    %114 = vector.load %arg1[%c8, %c0_43, %c0_44] : memref<32x8x128xf32, #tpu.memory_space<vmem>>, vector<1x8x128xf32>
    %115 = vector.shape_cast %114 : vector<1x8x128xf32> to vector<8x128xf32>
    %c9 = arith.constant 9 : index
    %c0_45 = arith.constant 0 : index
    %c0_46 = arith.constant 0 : index
    %116 = vector.load %arg1[%c9, %c0_45, %c0_46] : memref<32x8x128xf32, #tpu.memory_space<vmem>>, vector<1x8x128xf32>
    %117 = vector.shape_cast %116 : vector<1x8x128xf32> to vector<8x128xf32>
    %c10 = arith.constant 10 : index
    %c0_47 = arith.constant 0 : index
    %c0_48 = arith.constant 0 : index
    %118 = vector.load %arg1[%c10, %c0_47, %c0_48] : memref<32x8x128xf32, #tpu.memory_space<vmem>>, vector<1x8x128xf32>
    %119 = vector.shape_cast %118 : vector<1x8x128xf32> to vector<8x128xf32>
    %c11 = arith.constant 11 : index
    %c0_49 = arith.constant 0 : index
    %c0_50 = arith.constant 0 : index
    %120 = vector.load %arg1[%c11, %c0_49, %c0_50] : memref<32x8x128xf32, #tpu.memory_space<vmem>>, vector<1x8x128xf32>
    %121 = vector.shape_cast %120 : vector<1x8x128xf32> to vector<8x128xf32>
    %122 = tpu.concatenate %106, %113 in 0 : vector<8x128xf32>, vector<8x128xf32> -> vector<16x128xf32>
    %c2_51 = arith.constant 2 : index
    %c0_52 = arith.constant 0 : index
    %c0_53 = arith.constant 0 : index
    %123 = vector.load %arg4[%c2_51, %c0_52, %c0_53] : memref<4x128x128xf32, #tpu.memory_space<vmem>>, vector<1x128x128xf32>
    %124 = vector.shape_cast %123 : vector<1x128x128xf32> to vector<128x128xf32>
    %cst_54 = arith.constant dense<0.000000e+00> : vector<16x128xf32>
    %125 = tpu.matmul %122, %124, %cst_54 {dimension_numbers = #tpu.dot_dimension_numbers<[1], [0], [0], [1], [0, 0, 1, 1], [], []>} : vector<16x128xf32>, vector<128x128xf32>, vector<16x128xf32> -> vector<16x128xf32>
    %126 = vector.extract_strided_slice %125 {offsets = [0, 0], sizes = [8, 128], strides = [1, 1]} : vector<16x128xf32> to vector<8x128xf32>
    %127 = vector.extract_strided_slice %125 {offsets = [8, 0], sizes = [8, 128], strides = [1, 1]} : vector<16x128xf32> to vector<8x128xf32>
    %128 = arith.mulf %23, %117 : vector<8x128xf32>
    %129 = arith.mulf %23, %119 : vector<8x128xf32>
    %130 = arith.mulf %115, %106 : vector<8x128xf32>
    %131 = arith.mulf %128, %113 : vector<8x128xf32>
    %132 = arith.subf %130, %131 : vector<8x128xf32>
    %133 = arith.mulf %129, %126 : vector<8x128xf32>
    %134 = arith.addf %132, %133 : vector<8x128xf32>
    %135 = arith.mulf %121, %127 : vector<8x128xf32>
    %136 = arith.subf %134, %135 : vector<8x128xf32>
    %137 = arith.mulf %115, %113 : vector<8x128xf32>
    %138 = arith.mulf %128, %106 : vector<8x128xf32>
    %139 = arith.addf %137, %138 : vector<8x128xf32>
    %140 = arith.mulf %129, %127 : vector<8x128xf32>
    %141 = arith.addf %139, %140 : vector<8x128xf32>
    %142 = arith.mulf %121, %126 : vector<8x128xf32>
    %143 = arith.addf %141, %142 : vector<8x128xf32>
    %c12 = arith.constant 12 : index
    %c0_55 = arith.constant 0 : index
    %c0_56 = arith.constant 0 : index
    %144 = vector.load %arg1[%c12, %c0_55, %c0_56] : memref<32x8x128xf32, #tpu.memory_space<vmem>>, vector<1x8x128xf32>
    %145 = vector.shape_cast %144 : vector<1x8x128xf32> to vector<8x128xf32>
    %c13 = arith.constant 13 : index
    %c0_57 = arith.constant 0 : index
    %c0_58 = arith.constant 0 : index
    %146 = vector.load %arg1[%c13, %c0_57, %c0_58] : memref<32x8x128xf32, #tpu.memory_space<vmem>>, vector<1x8x128xf32>
    %147 = vector.shape_cast %146 : vector<1x8x128xf32> to vector<8x128xf32>
    %c14 = arith.constant 14 : index
    %c0_59 = arith.constant 0 : index
    %c0_60 = arith.constant 0 : index
    %148 = vector.load %arg1[%c14, %c0_59, %c0_60] : memref<32x8x128xf32, #tpu.memory_space<vmem>>, vector<1x8x128xf32>
    %149 = vector.shape_cast %148 : vector<1x8x128xf32> to vector<8x128xf32>
    %c15 = arith.constant 15 : index
    %c0_61 = arith.constant 0 : index
    %c0_62 = arith.constant 0 : index
    %150 = vector.load %arg1[%c15, %c0_61, %c0_62] : memref<32x8x128xf32, #tpu.memory_space<vmem>>, vector<1x8x128xf32>
    %151 = vector.shape_cast %150 : vector<1x8x128xf32> to vector<8x128xf32>
    %152 = tpu.concatenate %136, %143 in 0 : vector<8x128xf32>, vector<8x128xf32> -> vector<16x128xf32>
    %c3_63 = arith.constant 3 : index
    %c0_64 = arith.constant 0 : index
    %c0_65 = arith.constant 0 : index
    %153 = vector.load %arg4[%c3_63, %c0_64, %c0_65] : memref<4x128x128xf32, #tpu.memory_space<vmem>>, vector<1x128x128xf32>
    %154 = vector.shape_cast %153 : vector<1x128x128xf32> to vector<128x128xf32>
    %cst_66 = arith.constant dense<0.000000e+00> : vector<16x128xf32>
    %155 = tpu.matmul %152, %154, %cst_66 {dimension_numbers = #tpu.dot_dimension_numbers<[1], [0], [0], [1], [0, 0, 1, 1], [], []>} : vector<16x128xf32>, vector<128x128xf32>, vector<16x128xf32> -> vector<16x128xf32>
    %156 = vector.extract_strided_slice %155 {offsets = [0, 0], sizes = [8, 128], strides = [1, 1]} : vector<16x128xf32> to vector<8x128xf32>
    %157 = vector.extract_strided_slice %155 {offsets = [8, 0], sizes = [8, 128], strides = [1, 1]} : vector<16x128xf32> to vector<8x128xf32>
    %158 = arith.mulf %30, %147 : vector<8x128xf32>
    %159 = arith.mulf %30, %149 : vector<8x128xf32>
    %160 = arith.mulf %145, %136 : vector<8x128xf32>
    %161 = arith.mulf %158, %143 : vector<8x128xf32>
    %162 = arith.subf %160, %161 : vector<8x128xf32>
    %163 = arith.mulf %159, %156 : vector<8x128xf32>
    %164 = arith.addf %162, %163 : vector<8x128xf32>
    %165 = arith.mulf %151, %157 : vector<8x128xf32>
    %166 = arith.subf %164, %165 : vector<8x128xf32>
    %167 = arith.mulf %145, %143 : vector<8x128xf32>
    %168 = arith.mulf %158, %136 : vector<8x128xf32>
    %169 = arith.addf %167, %168 : vector<8x128xf32>
    %170 = arith.mulf %159, %157 : vector<8x128xf32>
    %171 = arith.addf %169, %170 : vector<8x128xf32>
    %172 = arith.mulf %151, %156 : vector<8x128xf32>
    %173 = arith.addf %171, %172 : vector<8x128xf32>
    %174 = arith.mulf %166, %47 : vector<8x128xf32>
    %175 = arith.mulf %173, %47 : vector<8x128xf32>
    %c16 = arith.constant 16 : index
    %c0_67 = arith.constant 0 : index
    %c0_68 = arith.constant 0 : index
    %176 = vector.load %arg1[%c16, %c0_67, %c0_68] : memref<32x8x128xf32, #tpu.memory_space<vmem>>, vector<1x8x128xf32>
    %177 = vector.shape_cast %176 : vector<1x8x128xf32> to vector<8x128xf32>
    %c17 = arith.constant 17 : index
    %c0_69 = arith.constant 0 : index
    %c0_70 = arith.constant 0 : index
    %178 = vector.load %arg1[%c17, %c0_69, %c0_70] : memref<32x8x128xf32, #tpu.memory_space<vmem>>, vector<1x8x128xf32>
    %179 = vector.shape_cast %178 : vector<1x8x128xf32> to vector<8x128xf32>
    %c18 = arith.constant 18 : index
    %c0_71 = arith.constant 0 : index
    %c0_72 = arith.constant 0 : index
    %180 = vector.load %arg1[%c18, %c0_71, %c0_72] : memref<32x8x128xf32, #tpu.memory_space<vmem>>, vector<1x8x128xf32>
    %181 = vector.shape_cast %180 : vector<1x8x128xf32> to vector<8x128xf32>
    %c19 = arith.constant 19 : index
    %c0_73 = arith.constant 0 : index
    %c0_74 = arith.constant 0 : index
    %182 = vector.load %arg1[%c19, %c0_73, %c0_74] : memref<32x8x128xf32, #tpu.memory_space<vmem>>, vector<1x8x128xf32>
    %183 = vector.shape_cast %182 : vector<1x8x128xf32> to vector<8x128xf32>
    %184 = tpu.concatenate %174, %175 in 0 : vector<8x128xf32>, vector<8x128xf32> -> vector<16x128xf32>
    %c0_75 = arith.constant 0 : index
    %c0_76 = arith.constant 0 : index
    %c0_77 = arith.constant 0 : index
    %185 = vector.load %arg4[%c0_75, %c0_76, %c0_77] : memref<4x128x128xf32, #tpu.memory_space<vmem>>, vector<1x128x128xf32>
    %186 = vector.shape_cast %185 : vector<1x128x128xf32> to vector<128x128xf32>
    %cst_78 = arith.constant dense<0.000000e+00> : vector<16x128xf32>
    %187 = tpu.matmul %184, %186, %cst_78 {dimension_numbers = #tpu.dot_dimension_numbers<[1], [0], [0], [1], [0, 0, 1, 1], [], []>} : vector<16x128xf32>, vector<128x128xf32>, vector<16x128xf32> -> vector<16x128xf32>
    %188 = vector.extract_strided_slice %187 {offsets = [0, 0], sizes = [8, 128], strides = [1, 1]} : vector<16x128xf32> to vector<8x128xf32>
    %189 = vector.extract_strided_slice %187 {offsets = [8, 0], sizes = [8, 128], strides = [1, 1]} : vector<16x128xf32> to vector<8x128xf32>
    %190 = arith.mulf %9, %179 : vector<8x128xf32>
    %191 = arith.mulf %9, %181 : vector<8x128xf32>
    %192 = arith.mulf %177, %174 : vector<8x128xf32>
    %193 = arith.mulf %190, %175 : vector<8x128xf32>
    %194 = arith.subf %192, %193 : vector<8x128xf32>
    %195 = arith.mulf %191, %188 : vector<8x128xf32>
    %196 = arith.addf %194, %195 : vector<8x128xf32>
    %197 = arith.mulf %183, %189 : vector<8x128xf32>
    %198 = arith.subf %196, %197 : vector<8x128xf32>
    %199 = arith.mulf %177, %175 : vector<8x128xf32>
    %200 = arith.mulf %190, %174 : vector<8x128xf32>
    %201 = arith.addf %199, %200 : vector<8x128xf32>
    %202 = arith.mulf %191, %189 : vector<8x128xf32>
    %203 = arith.addf %201, %202 : vector<8x128xf32>
    %204 = arith.mulf %183, %188 : vector<8x128xf32>
    %205 = arith.addf %203, %204 : vector<8x128xf32>
    %c20 = arith.constant 20 : index
    %c0_79 = arith.constant 0 : index
    %c0_80 = arith.constant 0 : index
    %206 = vector.load %arg1[%c20, %c0_79, %c0_80] : memref<32x8x128xf32, #tpu.memory_space<vmem>>, vector<1x8x128xf32>
    %207 = vector.shape_cast %206 : vector<1x8x128xf32> to vector<8x128xf32>
    %c21 = arith.constant 21 : index
    %c0_81 = arith.constant 0 : index
    %c0_82 = arith.constant 0 : index
    %208 = vector.load %arg1[%c21, %c0_81, %c0_82] : memref<32x8x128xf32, #tpu.memory_space<vmem>>, vector<1x8x128xf32>
    %209 = vector.shape_cast %208 : vector<1x8x128xf32> to vector<8x128xf32>
    %c22 = arith.constant 22 : index
    %c0_83 = arith.constant 0 : index
    %c0_84 = arith.constant 0 : index
    %210 = vector.load %arg1[%c22, %c0_83, %c0_84] : memref<32x8x128xf32, #tpu.memory_space<vmem>>, vector<1x8x128xf32>
    %211 = vector.shape_cast %210 : vector<1x8x128xf32> to vector<8x128xf32>
    %c23 = arith.constant 23 : index
    %c0_85 = arith.constant 0 : index
    %c0_86 = arith.constant 0 : index
    %212 = vector.load %arg1[%c23, %c0_85, %c0_86] : memref<32x8x128xf32, #tpu.memory_space<vmem>>, vector<1x8x128xf32>
    %213 = vector.shape_cast %212 : vector<1x8x128xf32> to vector<8x128xf32>
    %214 = tpu.concatenate %198, %205 in 0 : vector<8x128xf32>, vector<8x128xf32> -> vector<16x128xf32>
    %c1_87 = arith.constant 1 : index
    %c0_88 = arith.constant 0 : index
    %c0_89 = arith.constant 0 : index
    %215 = vector.load %arg4[%c1_87, %c0_88, %c0_89] : memref<4x128x128xf32, #tpu.memory_space<vmem>>, vector<1x128x128xf32>
    %216 = vector.shape_cast %215 : vector<1x128x128xf32> to vector<128x128xf32>
    %cst_90 = arith.constant dense<0.000000e+00> : vector<16x128xf32>
    %217 = tpu.matmul %214, %216, %cst_90 {dimension_numbers = #tpu.dot_dimension_numbers<[1], [0], [0], [1], [0, 0, 1, 1], [], []>} : vector<16x128xf32>, vector<128x128xf32>, vector<16x128xf32> -> vector<16x128xf32>
    %218 = vector.extract_strided_slice %217 {offsets = [0, 0], sizes = [8, 128], strides = [1, 1]} : vector<16x128xf32> to vector<8x128xf32>
    %219 = vector.extract_strided_slice %217 {offsets = [8, 0], sizes = [8, 128], strides = [1, 1]} : vector<16x128xf32> to vector<8x128xf32>
    %220 = arith.mulf %16, %209 : vector<8x128xf32>
    %221 = arith.mulf %16, %211 : vector<8x128xf32>
    %222 = arith.mulf %207, %198 : vector<8x128xf32>
    %223 = arith.mulf %220, %205 : vector<8x128xf32>
    %224 = arith.subf %222, %223 : vector<8x128xf32>
    %225 = arith.mulf %221, %218 : vector<8x128xf32>
    %226 = arith.addf %224, %225 : vector<8x128xf32>
    %227 = arith.mulf %213, %219 : vector<8x128xf32>
    %228 = arith.subf %226, %227 : vector<8x128xf32>
    %229 = arith.mulf %207, %205 : vector<8x128xf32>
    %230 = arith.mulf %220, %198 : vector<8x128xf32>
    %231 = arith.addf %229, %230 : vector<8x128xf32>
    %232 = arith.mulf %221, %219 : vector<8x128xf32>
    %233 = arith.addf %231, %232 : vector<8x128xf32>
    %234 = arith.mulf %213, %218 : vector<8x128xf32>
    %235 = arith.addf %233, %234 : vector<8x128xf32>
    %c24 = arith.constant 24 : index
    %c0_91 = arith.constant 0 : index
    %c0_92 = arith.constant 0 : index
    %236 = vector.load %arg1[%c24, %c0_91, %c0_92] : memref<32x8x128xf32, #tpu.memory_space<vmem>>, vector<1x8x128xf32>
    %237 = vector.shape_cast %236 : vector<1x8x128xf32> to vector<8x128xf32>
    %c25 = arith.constant 25 : index
    %c0_93 = arith.constant 0 : index
    %c0_94 = arith.constant 0 : index
    %238 = vector.load %arg1[%c25, %c0_93, %c0_94] : memref<32x8x128xf32, #tpu.memory_space<vmem>>, vector<1x8x128xf32>
    %239 = vector.shape_cast %238 : vector<1x8x128xf32> to vector<8x128xf32>
    %c26 = arith.constant 26 : index
    %c0_95 = arith.constant 0 : index
    %c0_96 = arith.constant 0 : index
    %240 = vector.load %arg1[%c26, %c0_95, %c0_96] : memref<32x8x128xf32, #tpu.memory_space<vmem>>, vector<1x8x128xf32>
    %241 = vector.shape_cast %240 : vector<1x8x128xf32> to vector<8x128xf32>
    %c27 = arith.constant 27 : index
    %c0_97 = arith.constant 0 : index
    %c0_98 = arith.constant 0 : index
    %242 = vector.load %arg1[%c27, %c0_97, %c0_98] : memref<32x8x128xf32, #tpu.memory_space<vmem>>, vector<1x8x128xf32>
    %243 = vector.shape_cast %242 : vector<1x8x128xf32> to vector<8x128xf32>
    %244 = tpu.concatenate %228, %235 in 0 : vector<8x128xf32>, vector<8x128xf32> -> vector<16x128xf32>
    %c2_99 = arith.constant 2 : index
    %c0_100 = arith.constant 0 : index
    %c0_101 = arith.constant 0 : index
    %245 = vector.load %arg4[%c2_99, %c0_100, %c0_101] : memref<4x128x128xf32, #tpu.memory_space<vmem>>, vector<1x128x128xf32>
    %246 = vector.shape_cast %245 : vector<1x128x128xf32> to vector<128x128xf32>
    %cst_102 = arith.constant dense<0.000000e+00> : vector<16x128xf32>
    %247 = tpu.matmul %244, %246, %cst_102 {dimension_numbers = #tpu.dot_dimension_numbers<[1], [0], [0], [1], [0, 0, 1, 1], [], []>} : vector<16x128xf32>, vector<128x128xf32>, vector<16x128xf32> -> vector<16x128xf32>
    %248 = vector.extract_strided_slice %247 {offsets = [0, 0], sizes = [8, 128], strides = [1, 1]} : vector<16x128xf32> to vector<8x128xf32>
    %249 = vector.extract_strided_slice %247 {offsets = [8, 0], sizes = [8, 128], strides = [1, 1]} : vector<16x128xf32> to vector<8x128xf32>
    %250 = arith.mulf %23, %239 : vector<8x128xf32>
    %251 = arith.mulf %23, %241 : vector<8x128xf32>
    %252 = arith.mulf %237, %228 : vector<8x128xf32>
    %253 = arith.mulf %250, %235 : vector<8x128xf32>
    %254 = arith.subf %252, %253 : vector<8x128xf32>
    %255 = arith.mulf %251, %248 : vector<8x128xf32>
    %256 = arith.addf %254, %255 : vector<8x128xf32>
    %257 = arith.mulf %243, %249 : vector<8x128xf32>
    %258 = arith.subf %256, %257 : vector<8x128xf32>
    %259 = arith.mulf %237, %235 : vector<8x128xf32>
    %260 = arith.mulf %250, %228 : vector<8x128xf32>
    %261 = arith.addf %259, %260 : vector<8x128xf32>
    %262 = arith.mulf %251, %249 : vector<8x128xf32>
    %263 = arith.addf %261, %262 : vector<8x128xf32>
    %264 = arith.mulf %243, %248 : vector<8x128xf32>
    %265 = arith.addf %263, %264 : vector<8x128xf32>
    %c28 = arith.constant 28 : index
    %c0_103 = arith.constant 0 : index
    %c0_104 = arith.constant 0 : index
    %266 = vector.load %arg1[%c28, %c0_103, %c0_104] : memref<32x8x128xf32, #tpu.memory_space<vmem>>, vector<1x8x128xf32>
    %267 = vector.shape_cast %266 : vector<1x8x128xf32> to vector<8x128xf32>
    %c29 = arith.constant 29 : index
    %c0_105 = arith.constant 0 : index
    %c0_106 = arith.constant 0 : index
    %268 = vector.load %arg1[%c29, %c0_105, %c0_106] : memref<32x8x128xf32, #tpu.memory_space<vmem>>, vector<1x8x128xf32>
    %269 = vector.shape_cast %268 : vector<1x8x128xf32> to vector<8x128xf32>
    %c30 = arith.constant 30 : index
    %c0_107 = arith.constant 0 : index
    %c0_108 = arith.constant 0 : index
    %270 = vector.load %arg1[%c30, %c0_107, %c0_108] : memref<32x8x128xf32, #tpu.memory_space<vmem>>, vector<1x8x128xf32>
    %271 = vector.shape_cast %270 : vector<1x8x128xf32> to vector<8x128xf32>
    %c31 = arith.constant 31 : index
    %c0_109 = arith.constant 0 : index
    %c0_110 = arith.constant 0 : index
    %272 = vector.load %arg1[%c31, %c0_109, %c0_110] : memref<32x8x128xf32, #tpu.memory_space<vmem>>, vector<1x8x128xf32>
    %273 = vector.shape_cast %272 : vector<1x8x128xf32> to vector<8x128xf32>
    %274 = tpu.concatenate %258, %265 in 0 : vector<8x128xf32>, vector<8x128xf32> -> vector<16x128xf32>
    %c3_111 = arith.constant 3 : index
    %c0_112 = arith.constant 0 : index
    %c0_113 = arith.constant 0 : index
    %275 = vector.load %arg4[%c3_111, %c0_112, %c0_113] : memref<4x128x128xf32, #tpu.memory_space<vmem>>, vector<1x128x128xf32>
    %276 = vector.shape_cast %275 : vector<1x128x128xf32> to vector<128x128xf32>
    %cst_114 = arith.constant dense<0.000000e+00> : vector<16x128xf32>
    %277 = tpu.matmul %274, %276, %cst_114 {dimension_numbers = #tpu.dot_dimension_numbers<[1], [0], [0], [1], [0, 0, 1, 1], [], []>} : vector<16x128xf32>, vector<128x128xf32>, vector<16x128xf32> -> vector<16x128xf32>
    %278 = vector.extract_strided_slice %277 {offsets = [0, 0], sizes = [8, 128], strides = [1, 1]} : vector<16x128xf32> to vector<8x128xf32>
    %279 = vector.extract_strided_slice %277 {offsets = [8, 0], sizes = [8, 128], strides = [1, 1]} : vector<16x128xf32> to vector<8x128xf32>
    %280 = arith.mulf %30, %269 : vector<8x128xf32>
    %281 = arith.mulf %30, %271 : vector<8x128xf32>
    %282 = arith.mulf %267, %258 : vector<8x128xf32>
    %283 = arith.mulf %280, %265 : vector<8x128xf32>
    %284 = arith.subf %282, %283 : vector<8x128xf32>
    %285 = arith.mulf %281, %278 : vector<8x128xf32>
    %286 = arith.addf %284, %285 : vector<8x128xf32>
    %287 = arith.mulf %273, %279 : vector<8x128xf32>
    %288 = arith.subf %286, %287 : vector<8x128xf32>
    %289 = arith.mulf %267, %265 : vector<8x128xf32>
    %290 = arith.mulf %280, %258 : vector<8x128xf32>
    %291 = arith.addf %289, %290 : vector<8x128xf32>
    %292 = arith.mulf %281, %279 : vector<8x128xf32>
    %293 = arith.addf %291, %292 : vector<8x128xf32>
    %294 = arith.mulf %273, %278 : vector<8x128xf32>
    %295 = arith.addf %293, %294 : vector<8x128xf32>
    %296 = arith.mulf %288, %47 : vector<8x128xf32>
    %297 = arith.mulf %295, %47 : vector<8x128xf32>
    %298 = arith.mulf %296, %296 : vector<8x128xf32>
    %299 = arith.mulf %297, %297 : vector<8x128xf32>
    %300 = arith.addf %298, %299 : vector<8x128xf32>
    %c0_115 = arith.constant 0 : index
    %c0_116 = arith.constant 0 : index
    %301 = vector.load %arg2[%c0_115, %c0_116] : memref<128x16xf32, #tpu.memory_space<vmem>>, vector<128x16xf32>
    %cst_117 = arith.constant dense<0.000000e+00> : vector<8x16xf32>
    %302 = tpu.matmul %300, %301, %cst_117 {dimension_numbers = #tpu.dot_dimension_numbers<[1], [0], [0], [1], [0, 0, 1, 1], [], []>} : vector<8x128xf32>, vector<128x16xf32>, vector<8x16xf32> -> vector<8x16xf32>
    %303 = tpu.iota {dimensions = array<i32: 1>} : vector<8x16xi32>
    %c1_i32_118 = arith.constant 1 : i32
    %304 = vector.broadcast %c1_i32_118 : i32 to vector<8x16xi32>
    %305 = arith.andi %303, %304 : vector<8x16xi32>
    %c0_i32_119 = arith.constant 0 : i32
    %306 = vector.broadcast %c0_i32_119 : i32 to vector<8x16xi32>
    %307 = arith.cmpi eq, %305, %306 : vector<8x16xi32>
    %c0_120 = arith.constant 0 : index
    %308 = memref.load %arg3[%c0_120] : memref<2xf32, #tpu.memory_space<smem>>
    %c1_121 = arith.constant 1 : index
    %309 = memref.load %arg3[%c1_121] : memref<2xf32, #tpu.memory_space<smem>>
    %310 = vector.broadcast %308 : f32 to vector<8x16xf32>
    %311 = vector.broadcast %309 : f32 to vector<8x16xf32>
    %312 = arith.select %307, %310, %311 : vector<8x16xi1>, vector<8x16xf32>
    %cst_122 = arith.constant 1.000000e+00 : f32
    %313 = vector.broadcast %cst_122 : f32 to vector<8x16xf32>
    %314 = arith.addf %313, %302 : vector<8x16xf32>
    %cst_123 = arith.constant 5.000000e-01 : f32
    %315 = vector.broadcast %cst_123 : f32 to vector<8x16xf32>
    %316 = arith.mulf %314, %315 : vector<8x16xf32>
    %317 = arith.mulf %316, %312 : vector<8x16xf32>
    %c0_124 = arith.constant 0 : index
    %c0_125 = arith.constant 0 : index
    %318 = vector.load %arg5[%c0_124, %c0_125] : memref<8x16xf32, #tpu.memory_space<vmem>>, vector<8x16xf32>
    tpu.vector_store %arg5[%c0_124, %c0_125], %317 {strides = array<i32>} : memref<8x16xf32, #tpu.memory_space<vmem>>, vector<8x16xf32>,
    return
  }
  func.func @transform_0(%arg0: i32) -> (i32, i32, i32) {
    %c0_i32 = arith.constant 0 : i32
    %c0_i32_0 = arith.constant 0 : i32
    %c0_i32_1 = arith.constant 0 : i32
    return %arg0, %c0_i32, %c0_i32_0 : i32, i32, i32
  }
  func.func @transform_1(%arg0: i32) -> (i32, i32) {
    %c0_i32 = arith.constant 0 : i32
    %c0_i32_0 = arith.constant 0 : i32
    %c0_i32_1 = arith.constant 0 : i32
    return %c0_i32, %c0_i32_0 : i32, i32
  }
  func.func @transform_2(%arg0: i32) -> i32 {
    %c0_i32 = arith.constant 0 : i32
    %c0_i32_0 = arith.constant 0 : i32
    return %c0_i32 : i32
  }
  func.func @transform_3(%arg0: i32) -> (i32, i32, i32) {
    %c0_i32 = arith.constant 0 : i32
    %c0_i32_0 = arith.constant 0 : i32
    %c0_i32_1 = arith.constant 0 : i32
    %c0_i32_2 = arith.constant 0 : i32
    return %c0_i32, %c0_i32_0, %c0_i32_1 : i32, i32, i32
  }
  func.func @transform_4(%arg0: i32) -> (i32, i32) {
    %c0_i32 = arith.constant 0 : i32
    %c0_i32_0 = arith.constant 0 : i32
    return %arg0, %c0_i32 : i32, i32
  }
}

</mosaic_0001>

<llo_original>
// kernel: tpu_custom_call.1
$region0: #{tpu_custom_call.1}
  #allocation0 [shape = 'u32[]', space=smem, size = 0x4, offset = 0x4, fixed_abs, tag = 'smem constant byte address 0x4 - core index']
  #allocation1 [shape = 'u32[144,128]{1,0:T(1,128)}', space=vmem, size = 0x12000, scoped, tag = 'internal scratch']
  %s0 = inlined_call_operand.hbm [shape: f32[8,128], index: 0, kind: input, shape index: {}]
  %s1 = inlined_call_operand.hbm [shape: f32[8,128], index: 1, kind: output, shape index: {}]
  %s2 = sld [smem:[#allocation0]]
  $region18: #{tpu_custom_call.1} parent=0
    _
  %s4 = ssub.s32 1, %s2
  %s5 = scalar_select 0, %s4, %s2
  $region1: #{tpu_custom_call.1} parent=0
    #allocation2 [shape = 'u8[4096]{0}', space=vmem, size = 0x1000, scoped, tag = 'input window, operand 0, single buffered']
    #allocation3 [shape = 's32[1]{0}', space=sflag, size = 0x4, scoped, tag = 'scoped memory for tpu_custom_call.1']
    #allocation4 [shape = 's32[1]{0}', space=sflag, size = 0x4, scoped, tag = 'scoped memory for tpu_custom_call.1']
    #allocation5 [shape = 'u8[4096]{0}', space=vmem, size = 0x1000, scoped, tag = 'output window, operand 0, single buffered']
    %6 = vsyncpa [#allocation3], 0
    %7 = vsyncpa [#allocation4], 0
    // Predicated region
    $region2: #{tpu_custom_call.1} parent=1 // pred_check
      _
    $region3: #{tpu_custom_call.1} parent=1 // pred_check_branch
      %9 = sbr.rel (0) target = $region5
    $region4: #{tpu_custom_call.1} parent=1 // pred_region
      %s11 = ssub.s32 128, 128
      %12 = vsyncadd [#allocation3], %s11
      %s14 = sshll.u32 [#allocation2], 4
      %s15 = int_to_ptr.vmem [resolvable:$true] %s14
      %17 = dma.hbm_to_vmem [thread:$0]  %s0, 128, %s15, [#allocation3]
    $region5: #{tpu_custom_call.1} parent=1 // pred_fallthru
      _
    // Predicated region
    $region6: #{tpu_custom_call.1} parent=1 // pred_check
      _
    $region7: #{tpu_custom_call.1} parent=1 // pred_check_branch
      %19 = sbr.rel (0) target = $region9
    $region8: #{tpu_custom_call.1} parent=1 // pred_region
      %20 = dma.done [#allocation3], 128
    $region9: #{tpu_custom_call.1} parent=1 // pred_fallthru
      _
    %v21 = vld [vmem:[#allocation2] sm:$0xff]
    %22 = vrot.lane.b32.xlu0 %v21, 1
    %v23 = vpop.permute.xlu0 %22
    %24 = vst [vmem:[#allocation5] sm:$0xff] %v23
    // Predicated region
    $region10: #{tpu_custom_call.1} parent=1 // pred_check
      _
    $region11: #{tpu_custom_call.1} parent=1 // pred_check_branch
      %26 = sbr.rel (0) target = $region13
    $region12: #{tpu_custom_call.1} parent=1 // pred_region
      %s28 = ssub.s32 128, 128
      %29 = vsyncadd [#allocation4], %s28
      %s31 = sshll.u32 [#allocation5], 4
      %s32 = int_to_ptr.vmem [resolvable:$true] %s31
      %34 = dma.vmem_to_hbm [thread:$0]  %s32, 128, %s1, [#allocation4]
    $region13: #{tpu_custom_call.1} parent=1 // pred_fallthru
      _
    // Predicated region
    $region14: #{tpu_custom_call.1} parent=1 // pred_check
      _
    $region15: #{tpu_custom_call.1} parent=1 // pred_check_branch
      %36 = sbr.rel (0) target = $region17
    $region16: #{tpu_custom_call.1} parent=1 // pred_region
      %37 = dma.done [#allocation4], 128
    $region17: #{tpu_custom_call.1} parent=1 // pred_fallthru
      _
    %38 = vsyncpa [#allocation3], 1
    %39 = vsyncpa [#allocation4], 1

// kernel: forward.1
$region0: #{forward.1}
  #allocation0 [shape = 'u32[]', space=smem, size = 0x4, offset = 0x4, fixed_abs, tag = 'smem constant byte address 0x4 - core index']
  #allocation1 [shape = 'u32[144,128]{1,0:T(1,128)}', space=vmem, size = 0x12000, scoped, tag = 'internal scratch']
  %s0 = inlined_call_operand.vmem [shape: f32[64,8,128], index: 0, kind: input, shape index: {}]
  %s1 = inlined_call_operand.vmem [shape: f32[128,16], index: 1, kind: input, shape index: {}]
  %s2 = inlined_call_operand.vmem [shape: f32[2], index: 2, kind: input, shape index: {}]
  %s3 = inlined_call_operand.vmem [shape: f32[4,128,128], index: 3, kind: input, shape index: {}]
  %s4 = inlined_call_operand.vmem [shape: f32[16,16], index: 4, kind: output, shape index: {}]
  %s5 = sld [smem:[#allocation0]]
  $region53: #{forward.1} parent=0
    _
  %s7 = ssub.s32 1, %s5
  %s8 = scalar_select 0, %s7, %s5
  $region1: #{forward.1} parent=0
    #allocation2 [shape = 'u8[512]{0}', space=smem, size = 0x200, scoped, tag = 'input window, operand 2, single buffered']
    #allocation3 [shape = 's32[2]{0}', space=sflag, size = 0x8, scoped, tag = 'scoped memory for forward.1']
    %9 = vsyncpa [#allocation3], 0
    loop: start=0, step=1, limit=4
    $region2: #{forward.1} parent=1 // loop_pre_header
      _
    $region3: #{forward.1} parent=1 // loop_header
      %s11 = sphi 0, %s15
      %p12 = scmp.ge.s32.totalorder %s11, 4
      %s21 = sphi 0, %s23
      %s24 = sphi 0, %s21
      %s25 = sphi 0, %s24
      %s41 = sphi 0, %s25
      %s45 = sphi 0, %s45
      %s47 = sphi 0, %s45
      %s48 = sphi 0, %s47
      %s62 = sphi 0, %s48
      %s66 = sphi 0, %s66
      %s68 = sphi 0, %s66
      %s69 = sphi 0, %s68
      %s83 = sphi 0, %s69
      %s87 = sphi 0, %s87
      %s89 = sphi 0, %s87
      %s90 = sphi 0, %s89
      %s104 = sphi 0, %s90
      %s110 = sphi 0, %s112
      %s113 = sphi 0, %s110
      %s114 = sphi 0, %s113
      %s130 = sphi 0, %s114
    $region4: #{forward.1} parent=1 // loop_header_branch
      %14 = sbr.rel (%p12) target = $region8
    $region5: #{forward.1} parent=1 // loop_body
      %s16 = ssub.s32 %s11, 1
      %s17 = ssub.s32 %s11, 2
      %s18 = sadd.s32 %s11, 1
      %s19 = ssub.s32 %s11, %s18
      %p20 = scmp.eq.s32.totalorder %s19, 0
      %s22 = sadd.s32 %s21, 1
      %s23 = scalar_select %p20, %s21, %s22
      %p26 = pneg %p20
      %p27 = scmp.eq.s32.totalorder %s11, 1
      %p28 = por %p26, %p27
      %p29 = scmp.ne.s32.totalorder %s21, %s24
      %p30 = scmp.eq.s32.totalorder %s11, 0
      %p31 = por %p29, %p30
      %p32 = scmp.ne.s32.totalorder %s21, %s24
      %p33 = scmp.eq.s32.totalorder %s16, 1
      %p34 = por %p32, %p33
      %p35 = scmp.ne.s32.totalorder %s24, %s25
      %p36 = scmp.eq.s32.totalorder %s16, 0
      %p37 = por %p35, %p36
      %p38 = scmp.ne.s32.totalorder %s24, %s25
      %p39 = scmp.eq.s32.totalorder %s17, 1
      %p40 = por %p38, %p39
      %p42 = scmp.ne.s32.totalorder %s25, %s41
      %p43 = scmp.eq.s32.totalorder %s17, 0
      %p44 = por %p42, %p43
      %s46 = sadd.s32 %s45, 1
      %p49 = scmp.eq.s32.totalorder %s11, 1
      %p50 = scmp.ne.s32.totalorder %s45, %s47
      %p51 = scmp.eq.s32.totalorder %s11, 0
      %p52 = por %p50, %p51
      %p53 = scmp.ne.s32.totalorder %s45, %s47
      %p54 = scmp.eq.s32.totalorder %s16, 1
      %p55 = por %p53, %p54
      %p56 = scmp.ne.s32.totalorder %s47, %s48
      %p57 = scmp.eq.s32.totalorder %s16, 0
      %p58 = por %p56, %p57
      %p59 = scmp.ne.s32.totalorder %s47, %s48
      %p60 = scmp.eq.s32.totalorder %s17, 1
      %p61 = por %p59, %p60
      %p63 = scmp.ne.s32.totalorder %s48, %s62
      %p64 = scmp.eq.s32.totalorder %s17, 0
      %p65 = por %p63, %p64
      %s67 = sadd.s32 %s66, 1
      %p70 = scmp.eq.s32.totalorder %s11, 1
      %p71 = scmp.ne.s32.totalorder %s66, %s68
      %p72 = scmp.eq.s32.totalorder %s11, 0
      %p73 = por %p71, %p72
      %p74 = scmp.ne.s32.totalorder %s66, %s68
      %p75 = scmp.eq.s32.totalorder %s16, 1
      %p76 = por %p74, %p75
      %p77 = scmp.ne.s32.totalorder %s68, %s69
      %p78 = scmp.eq.s32.totalorder %s16, 0
      %p79 = por %p77, %p78
      %p80 = scmp.ne.s32.totalorder %s68, %s69
      %p81 = scmp.eq.s32.totalorder %s17, 1
      %p82 = por %p80, %p81
      %p84 = scmp.ne.s32.totalorder %s69, %s83
      %p85 = scmp.eq.s32.totalorder %s17, 0
      %p86 = por %p84, %p85
      %s88 = sadd.s32 %s87, 1
      %p91 = scmp.eq.s32.totalorder %s11, 1
      %p92 = scmp.ne.s32.totalorder %s87, %s89
      %p93 = scmp.eq.s32.totalorder %s11, 0
      %p94 = por %p92, %p93
      %p95 = scmp.ne.s32.totalorder %s87, %s89
      %p96 = scmp.eq.s32.totalorder %s16, 1
      %p97 = por %p95, %p96
      %p98 = scmp.ne.s32.totalorder %s89, %s90
      %p99 = scmp.eq.s32.totalorder %s16, 0
      %p100 = por %p98, %p99
      %p101 = scmp.ne.s32.totalorder %s89, %s90
      %p102 = scmp.eq.s32.totalorder %s17, 1
      %p103 = por %p101, %p102
      %p105 = scmp.ne.s32.totalorder %s90, %s104
      %p106 = scmp.eq.s32.totalorder %s17, 0
      %p107 = por %p105, %p106
      %s108 = ssub.s32 %s11, %s18
      %p109 = scmp.eq.s32.totalorder %s108, 0
      %s111 = sadd.s32 %s110, 1
      %s112 = scalar_select %p109, %s110, %s111
      %p115 = pneg %p109
      %p116 = scmp.eq.s32.totalorder %s11, 1
      %p117 = por %p115, %p116
      %p118 = scmp.ne.s32.totalorder %s110, %s113
      %p119 = scmp.eq.s32.totalorder %s11, 0
      %p120 = por %p118, %p119
      %p121 = scmp.ne.s32.totalorder %s110, %s113
      %p122 = scmp.eq.s32.totalorder %s16, 1
      %p123 = por %p121, %p122
      %p124 = scmp.ne.s32.totalorder %s113, %s114
      %p125 = scmp.eq.s32.totalorder %s16, 0
      %p126 = por %p124, %p125
      %p127 = scmp.ne.s32.totalorder %s113, %s114
      %p128 = scmp.eq.s32.totalorder %s17, 1
      %p129 = por %p127, %p128
      %p131 = scmp.ne.s32.totalorder %s114, %s130
      %p132 = scmp.eq.s32.totalorder %s17, 0
      %p133 = por %p131, %p132
      %p134 = scmp.le.s32.totalorder 1, %s11
      %p135 = scmp.lt.s32.totalorder %s11, 3
      %p136 = pnand %p134, %p135
      %p137 = pneg %p136
      // Predicated region
      $region9: #{forward.1} parent=5 // pred_check
        _
      $region10: #{forward.1} parent=5 // pred_check_branch
        %139 = sbr.rel (%p136) target = $region12
      $region11: #{forward.1} parent=5 // pred_region
        %s140 = ssub.s32 %s11, 1
        // Predicated region
        $region13: #{forward.1} parent=11 // pred_check
          %p141 = pneg %p58
        $region14: #{forward.1} parent=11 // pred_check_branch
          %143 = sbr.rel (%p141) target = $region16
        $region15: #{forward.1} parent=11 // pred_region
          _
        $region16: #{forward.1} parent=11 // pred_fallthru
          _
        // Predicated region
        $region17: #{forward.1} parent=11 // pred_check
          %p144 = pneg %p79
        $region18: #{forward.1} parent=11 // pred_check_branch
          %146 = sbr.rel (%p144) target = $region20
        $region19: #{forward.1} parent=11 // pred_region
          %s148 = ssub.s32 16, 16
          %149 = vsyncadd [#allocation3], %s148
          %s151 = sshll.u32 %s2, 4
          %s152 = int_to_ptr.vmem [resolvable:$true] %s151
          %154 = dma.vmem_to_smem %s152, 16, [#allocation2], [#allocation3]
        $region20: #{forward.1} parent=11 // pred_fallthru
          _
        // Predicated region
        $region21: #{forward.1} parent=11 // pred_check
          %p155 = pneg %p100
        $region22: #{forward.1} parent=11 // pred_check_branch
          %157 = sbr.rel (%p155) target = $region24
        $region23: #{forward.1} parent=11 // pred_region
          _
        $region24: #{forward.1} parent=11 // pred_fallthru
          _
      $region12: #{forward.1} parent=5 // pred_fallthru
        _
      %p158 = scmp.lt.s32.totalorder %s11, 2
      // Predicated region
      $region25: #{forward.1} parent=5 // pred_check
        %p159 = pneg %p158
      $region26: #{forward.1} parent=5 // pred_check_branch
        %161 = sbr.rel (%p159) target = $region28
      $region27: #{forward.1} parent=5 // pred_region
        // Predicated region
        $region29: #{forward.1} parent=27 // pred_check
          %p162 = pneg %p31
        $region30: #{forward.1} parent=27 // pred_check_branch
          %164 = sbr.rel (%p162) target = $region32
        $region31: #{forward.1} parent=27 // pred_region
          %s165 = smul.u32 32, %s11
          %p166 = scmp.lt.s32.totalorder %s165, 63
          %s167 = scalar_select %p166, %s165, 63
          %s168 = smul.addr %s167, 8
          %s169 = scalar_lea.vmem %s0, %s168
          %s170 = smul.u32 32, %s11
        $region32: #{forward.1} parent=27 // pred_fallthru
          _
      $region28: #{forward.1} parent=5 // pred_fallthru
        _
      %p171 = scmp.le.s32.totalorder 1, %s11
      %p172 = scmp.lt.s32.totalorder %s11, 3
      %p173 = pnand %p171, %p172
      %p174 = pneg %p173
      // Predicated region
      $region33: #{forward.1} parent=5 // pred_check
        _
      $region34: #{forward.1} parent=5 // pred_check_branch
        %176 = sbr.rel (%p173) target = $region36
      $region35: #{forward.1} parent=5 // pred_region
        %s177 = ssub.s32 %s11, 1
        // Predicated region
        $region37: #{forward.1} parent=35 // pred_check
          %p178 = pneg %p79
        $region38: #{forward.1} parent=35 // pred_check_branch
          %180 = sbr.rel (%p178) target = $region40
        $region39: #{forward.1} parent=35 // pred_region
          %181 = dma.done [#allocation3], 16
        $region40: #{forward.1} parent=35 // pred_fallthru
          _
        %182 = sfence
        %s183 = smul.u32 32, %s16
        %p184 = scmp.lt.s32.totalorder %s183, 63
        %s185 = scalar_select %p184, %s183, 63
        %s186 = smul.addr %s185, 8
        %s187 = scalar_lea.vmem %s0, %s186
        %p188 = pneg %p37
        %p189 = pneg %p34
        %p190 = pneg %p58
        %p191 = pneg %p55
        %p192 = pneg %p79
        %p193 = pneg %p76
        %p194 = pneg %p100
        %p195 = pneg %p97
        %p196 = pneg %p126
        %p197 = pneg %p123
        %p198 = scmp.lt.s32.totalorder %s16, 1
        %s199 = scalar_select %p198, %s16, 1
        %s200 = smul.addr %s199, 8
        %s201 = scalar_lea.vmem %s4, %s200
        %s202 = smul.u32 32, %s16
        %p203 = scmp.lt.s32.totalorder %s202, 63
        %s204 = scalar_select %p203, %s202, 63
        %s205 = smul.addr %s204, 8
        %s206 = scalar_lea.vmem %s0, %s205
        %s207 = smul.u32 32, %s16
        %p208 = scmp.lt.s32.totalorder %s16, 1
        %s209 = scalar_select %p208, %s16, 1
        %s210 = smul.addr %s209, 8
        %s211 = scalar_lea.vmem %s4, %s210
        %v212 = vlaneseq
        %v213 = vand.u32 %v212, 127
        %v214 = vand.u32 %v213, 15
        %v215 = vand.u32 %v214, 8
        %vm216 = vcmp.ne.s32.totalorder %v215, 0
        %v217 = vsel %vm216, -1.0, 1.0
        %v218 = vand.u32 %v214, 4
        %vm219 = vcmp.ne.s32.totalorder %v218, 0
        %v220 = vsel %vm219, -1.0, 1.0
        %v221 = vand.u32 %v214, 2
        %vm222 = vcmp.ne.s32.totalorder %v221, 0
        %v223 = vsel %vm222, -1.0, 1.0
        %v224 = vand.u32 %v214, 1
        %vm225 = vcmp.ne.s32.totalorder %v224, 0
        %v226 = vsel %vm225, -1.0, 1.0
        %vm227 = vmand %vm216, %vm219
        %v228 = vsel %vm227, -1.0, 1.0
        %vm229 = vmand %vm219, %vm222
        %v230 = vsub.f32 0.0, %v228
        %v231 = vsel %vm229, %v230, %v228
        %vm232 = vmand %vm222, %vm225
        %v233 = vsub.f32 0.0, %v231
        %v234 = vsel %vm232, %v233, %v231
        %vm235 = vmand %vm225, %vm216
        %v236 = vsub.f32 0.0, %v234
        %v237 = vsel %vm235, %v236, %v234
        %vm238 = vcmp.eq.s32.totalorder %v214, 0
        %v239 = vsel %vm238, 1.0, 0.0
        %v240 = vld [vmem:[%s206] sm:$0xff]
        %s241 = scalar_lea.vmem %s206, 8
        %v242 = vld [vmem:[%s241] sm:$0xff]
        %s243 = scalar_lea.vmem %s206, 16
        %v244 = vld [vmem:[%s243] sm:$0xff]
        %s245 = scalar_lea.vmem %s206, 24
        %v246 = vld [vmem:[%s245] sm:$0xff]
        %v247 = vld [vmem:[%s3] sm:$0xff]
        %v248 = vld [vmem:[%s3 + $0x8] sm:$0xff]
        %v249 = vld [vmem:[%s3 + $0x10] sm:$0xff]
        %v250 = vld [vmem:[%s3 + $0x18] sm:$0xff]
        %v251 = vld [vmem:[%s3 + $0x20] sm:$0xff]
        %v252 = vld [vmem:[%s3 + $0x28] sm:$0xff]
        %v253 = vld [vmem:[%s3 + $0x30] sm:$0xff]
        %v254 = vld [vmem:[%s3 + $0x38] sm:$0xff]
        %v255 = vld [vmem:[%s3 + $0x40] sm:$0xff]
        %v256 = vld [vmem:[%s3 + $0x48] sm:$0xff]
        %v257 = vld [vmem:[%s3 + $0x50] sm:$0xff]
        %v258 = vld [vmem:[%s3 + $0x58] sm:$0xff]
        %v259 = vld [vmem:[%s3 + $0x60] sm:$0xff]
        %v260 = vld [vmem:[%s3 + $0x68] sm:$0xff]
        %v261 = vld [vmem:[%s3 + $0x70] sm:$0xff]
        %v262 = vld [vmem:[%s3 + $0x78] sm:$0xff]
        %263 = vmatprep.subr.mxu0 0.0
        %264 = vmatpush1.msra.mxu0 %v247
        %265 = vmatprep.subr.mxu0 0.0
        %266 = vmatpush1.msra.mxu0 %v248
        %267 = vmatprep.subr.mxu0 0.0
        %268 = vmatpush1.msra.mxu0 %v249
        %269 = vmatprep.subr.mxu0 0.0
        %270 = vmatpush1.msra.mxu0 %v250
        %271 = vmatprep.subr.mxu0 0.0
        %272 = vmatpush1.msra.mxu0 %v251
        %273 = vmatprep.subr.mxu0 0.0
        %274 = vmatpush1.msra.mxu0 %v252
        %275 = vmatprep.subr.mxu0 0.0
        %276 = vmatpush1.msra.mxu0 %v253
        %277 = vmatprep.subr.mxu0 0.0
        %278 = vmatpush1.msra.mxu0 %v254
        %279 = vmatprep.subr.mxu0 0.0
        %280 = vmatpush1.msra.mxu0 %v255
        %281 = vmatprep.subr.mxu0 0.0
        %282 = vmatpush1.msra.mxu0 %v256
        %283 = vmatprep.subr.mxu0 0.0
        %284 = vmatpush1.msra.mxu0 %v257
        %285 = vmatprep.subr.mxu0 0.0
        %286 = vmatpush1.msra.mxu0 %v258
        %287 = vmatprep.subr.mxu0 0.0
        %288 = vmatpush1.msra.mxu0 %v259
        %289 = vmatprep.subr.mxu0 0.0
        %290 = vmatpush1.msra.mxu0 %v260
        %291 = vmatprep.subr.mxu0 0.0
        %292 = vmatpush1.msra.mxu0 %v261
        %293 = vmatprep.subr.mxu0 0.0
        %294 = vmatpush1.msra.mxu0 %v262
        %295 = vmatprep.subr.mxu0 0.0
        %296 = vmatpush1.msra.mxu0 0.0
        %297 = vmatprep.subr.mxu0 0.0
        %298 = vmatpush1.msra.mxu0 0.0
        %299 = vmatprep.subr.mxu0 0.0
        %300 = vmatpush1.msra.mxu0 0.0
        %301 = vmatprep.subr.mxu0 0.0
        %302 = vmatpush1.msra.mxu0 0.0
        %303 = vmatprep.subr.mxu0 0.0
        %304 = vmatpush1.msra.mxu0 0.0
        %305 = vmatprep.subr.mxu0 0.0
        %306 = vmatpush1.msra.mxu0 0.0
        %307 = vmatprep.subr.mxu0 0.0
        %308 = vmatpush1.msra.mxu0 0.0
        %309 = vmatprep.subr.mxu0 0.0
        %310 = vmatpush1.msra.mxu0 0.0
        %311 = vmatprep.subr.mxu0 0.0
        %312 = vmatpush1.msra.mxu0 0.0
        %313 = vmatprep.subr.mxu0 0.0
        %314 = vmatpush1.msra.mxu0 0.0
        %315 = vmatprep.subr.mxu0 0.0
        %316 = vmatpush1.msra.mxu0 0.0
        %317 = vmatprep.subr.mxu0 0.0
        %318 = vmatpush1.msra.mxu0 0.0
        %319 = vmatprep.subr.mxu0 0.0
        %320 = vmatpush1.msra.mxu0 0.0
        %321 = vmatprep.subr.mxu0 0.0
        %322 = vmatpush1.msra.mxu0 0.0
        %323 = vmatprep.subr.mxu0 0.0
        %324 = vmatpush1.msra.mxu0 0.0
        %325 = vmatprep.subr.mxu0 0.0
        %326 = vmatpush1.msra.mxu0 0.0
        %327 = vmatprep.mubr.f32.mxu0 0.0
        %328 = vmatmul.mubr.f32.gmra.mrb[0].mxu0 %v239
        %v329 = vpop.f32.mrb[0].mxu0
        %v330 = vadd.f32 0.0, %v329
        %v331 = vpop.f32.mrb[0].mxu0
        %332 = vmatprep.mubr.f32.mxu0 0.0
        %333 = vmatmul.mubr.f32.gmra.mrb[0].mxu0 0.0
        %v334 = vpop.f32.mrb[0].mxu0
        %v335 = vadd.f32 0.0, %v334
        %v336 = vpop.f32.mrb[0].mxu0
        %337 = vdwg.mxu0
        %v338 = vmul.f32 %v217, %v242
        %v339 = vmul.f32 %v217, %v244
        %v340 = vmul.f32 %v240, %v239
        %v341 = vmul.f32 %v338, 0.0
        %v342 = vsub.f32 %v340, %v341
        %v343 = vmul.f32 %v339, %v330
        %v344 = vadd.f32 %v342, %v343
        %v345 = vmul.f32 %v246, %v335
        %v346 = vsub.f32 %v344, %v345
        %v347 = vmul.f32 %v240, 0.0
        %v348 = vmul.f32 %v338, %v239
        %v349 = vadd.f32 %v347, %v348
        %v350 = vmul.f32 %v339, %v335
        %v351 = vadd.f32 %v349, %v350
        %v352 = vmul.f32 %v246, %v330
        %v353 = vadd.f32 %v351, %v352
        %s354 = scalar_lea.vmem %s206, 32
        %v355 = vld [vmem:[%s354] sm:$0xff]
        %s356 = scalar_lea.vmem %s206, 40
        %v357 = vld [vmem:[%s356] sm:$0xff]
        %s358 = scalar_lea.vmem %s206, 48
        %v359 = vld [vmem:[%s358] sm:$0xff]
        %s360 = scalar_lea.vmem %s206, 56
        %v361 = vld [vmem:[%s360] sm:$0xff]
        %s362 = scalar_lea.vmem %s3, 128
        %v363 = vld [vmem:[%s362] sm:$0xff]
        %v364 = vld [vmem:[%s362 + $0x8] sm:$0xff]
        %v365 = vld [vmem:[%s362 + $0x10] sm:$0xff]
        %v366 = vld [vmem:[%s362 + $0x18] sm:$0xff]
        %v367 = vld [vmem:[%s362 + $0x20] sm:$0xff]
        %v368 = vld [vmem:[%s362 + $0x28] sm:$0xff]
        %v369 = vld [vmem:[%s362 + $0x30] sm:$0xff]
        %v370 = vld [vmem:[%s362 + $0x38] sm:$0xff]
        %v371 = vld [vmem:[%s362 + $0x40] sm:$0xff]
        %v372 = vld [vmem:[%s362 + $0x48] sm:$0xff]
        %v373 = vld [vmem:[%s362 + $0x50] sm:$0xff]
        %v374 = vld [vmem:[%s362 + $0x58] sm:$0xff]
        %v375 = vld [vmem:[%s362 + $0x60] sm:$0xff]
        %v376 = vld [vmem:[%s362 + $0x68] sm:$0xff]
        %v377 = vld [vmem:[%s362 + $0x70] sm:$0xff]
        %v378 = vld [vmem:[%s362 + $0x78] sm:$0xff]
        %379 = vmatprep.subr.mxu0 0.0
        %380 = vmatpush1.msra.mxu0 %v363
        %381 = vmatprep.subr.mxu0 0.0
        %382 = vmatpush1.msra.mxu0 %v364
        %383 = vmatprep.subr.mxu0 0.0
        %384 = vmatpush1.msra.mxu0 %v365
        %385 = vmatprep.subr.mxu0 0.0
        %386 = vmatpush1.msra.mxu0 %v366
        %387 = vmatprep.subr.mxu0 0.0
        %388 = vmatpush1.msra.mxu0 %v367
        %389 = vmatprep.subr.mxu0 0.0
        %390 = vmatpush1.msra.mxu0 %v368
        %391 = vmatprep.subr.mxu0 0.0
        %392 = vmatpush1.msra.mxu0 %v369
        %393 = vmatprep.subr.mxu0 0.0
        %394 = vmatpush1.msra.mxu0 %v370
        %395 = vmatprep.subr.mxu0 0.0
        %396 = vmatpush1.msra.mxu0 %v371
        %397 = vmatprep.subr.mxu0 0.0
        %398 = vmatpush1.msra.mxu0 %v372
        %399 = vmatprep.subr.mxu0 0.0
        %400 = vmatpush1.msra.mxu0 %v373
        %401 = vmatprep.subr.mxu0 0.0
        %402 = vmatpush1.msra.mxu0 %v374
        %403 = vmatprep.subr.mxu0 0.0
        %404 = vmatpush1.msra.mxu0 %v375
        %405 = vmatprep.subr.mxu0 0.0
        %406 = vmatpush1.msra.mxu0 %v376
        %407 = vmatprep.subr.mxu0 0.0
        %408 = vmatpush1.msra.mxu0 %v377
        %409 = vmatprep.subr.mxu0 0.0
        %410 = vmatpush1.msra.mxu0 %v378
        %411 = vmatprep.subr.mxu0 0.0
        %412 = vmatpush1.msra.mxu0 0.0
        %413 = vmatprep.subr.mxu0 0.0
        %414 = vmatpush1.msra.mxu0 0.0
        %415 = vmatprep.subr.mxu0 0.0
        %416 = vmatpush1.msra.mxu0 0.0
        %417 = vmatprep.subr.mxu0 0.0
        %418 = vmatpush1.msra.mxu0 0.0
        %419 = vmatprep.subr.mxu0 0.0
        %420 = vmatpush1.msra.mxu0 0.0
        %421 = vmatprep.subr.mxu0 0.0
        %422 = vmatpush1.msra.mxu0 0.0
        %423 = vmatprep.subr.mxu0 0.0
        %424 = vmatpush1.msra.mxu0 0.0
        %425 = vmatprep.subr.mxu0 0.0
        %426 = vmatpush1.msra.mxu0 0.0
        %427 = vmatprep.subr.mxu0 0.0
        %428 = vmatpush1.msra.mxu0 0.0
        %429 = vmatprep.subr.mxu0 0.0
        %430 = vmatpush1.msra.mxu0 0.0
        %431 = vmatprep.subr.mxu0 0.0
        %432 = vmatpush1.msra.mxu0 0.0
        %433 = vmatprep.subr.mxu0 0.0
        %434 = vmatpush1.msra.mxu0 0.0
        %435 = vmatprep.subr.mxu0 0.0
        %436 = vmatpush1.msra.mxu0 0.0
        %437 = vmatprep.subr.mxu0 0.0
        %438 = vmatpush1.msra.mxu0 0.0
        %439 = vmatprep.subr.mxu0 0.0
        %440 = vmatpush1.msra.mxu0 0.0
        %441 = vmatprep.subr.mxu0 0.0
        %442 = vmatpush1.msra.mxu0 0.0
        %443 = vmatprep.mubr.f32.mxu0 0.0
        %444 = vmatmul.mubr.f32.gmra.mrb[0].mxu0 %v346
        %v445 = vpop.f32.mrb[0].mxu0
        %v446 = vadd.f32 0.0, %v445
        %v447 = vpop.f32.mrb[0].mxu0
        %448 = vmatprep.mubr.f32.mxu0 0.0
        %449 = vmatmul.mubr.f32.gmra.mrb[0].mxu0 %v353
        %v450 = vpop.f32.mrb[0].mxu0
        %v451 = vadd.f32 0.0, %v450
        %v452 = vpop.f32.mrb[0].mxu0
        %453 = vdwg.mxu0
        %v454 = vmul.f32 %v220, %v357
        %v455 = vmul.f32 %v220, %v359
        %v456 = vmul.f32 %v355, %v346
        %v457 = vmul.f32 %v454, %v353
        %v458 = vsub.f32 %v456, %v457
        %v459 = vmul.f32 %v455, %v446
        %v460 = vadd.f32 %v458, %v459
        %v461 = vmul.f32 %v361, %v451
        %v462 = vsub.f32 %v460, %v461
        %v463 = vmul.f32 %v355, %v353
        %v464 = vmul.f32 %v454, %v346
        %v465 = vadd.f32 %v463, %v464
        %v466 = vmul.f32 %v455, %v451
        %v467 = vadd.f32 %v465, %v466
        %v468 = vmul.f32 %v361, %v446
        %v469 = vadd.f32 %v467, %v468
        %s470 = scalar_lea.vmem %s206, 64
        %v471 = vld [vmem:[%s470] sm:$0xff]
        %s472 = scalar_lea.vmem %s206, 72
        %v473 = vld [vmem:[%s472] sm:$0xff]
        %s474 = scalar_lea.vmem %s206, 80
        %v475 = vld [vmem:[%s474] sm:$0xff]
        %s476 = scalar_lea.vmem %s206, 88
        %v477 = vld [vmem:[%s476] sm:$0xff]
        %s478 = scalar_lea.vmem %s3, 256
        %v479 = vld [vmem:[%s478] sm:$0xff]
        %v480 = vld [vmem:[%s478 + $0x8] sm:$0xff]
        %v481 = vld [vmem:[%s478 + $0x10] sm:$0xff]
        %v482 = vld [vmem:[%s478 + $0x18] sm:$0xff]
        %v483 = vld [vmem:[%s478 + $0x20] sm:$0xff]
        %v484 = vld [vmem:[%s478 + $0x28] sm:$0xff]
        %v485 = vld [vmem:[%s478 + $0x30] sm:$0xff]
        %v486 = vld [vmem:[%s478 + $0x38] sm:$0xff]
        %v487 = vld [vmem:[%s478 + $0x40] sm:$0xff]
        %v488 = vld [vmem:[%s478 + $0x48] sm:$0xff]
        %v489 = vld [vmem:[%s478 + $0x50] sm:$0xff]
        %v490 = vld [vmem:[%s478 + $0x58] sm:$0xff]
        %v491 = vld [vmem:[%s478 + $0x60] sm:$0xff]
        %v492 = vld [vmem:[%s478 + $0x68] sm:$0xff]
        %v493 = vld [vmem:[%s478 + $0x70] sm:$0xff]
        %v494 = vld [vmem:[%s478 + $0x78] sm:$0xff]
        %495 = vmatprep.subr.mxu0 0.0
        %496 = vmatpush1.msra.mxu0 %v479
        %497 = vmatprep.subr.mxu0 0.0
        %498 = vmatpush1.msra.mxu0 %v480
        %499 = vmatprep.subr.mxu0 0.0
        %500 = vmatpush1.msra.mxu0 %v481
        %501 = vmatprep.subr.mxu0 0.0
        %502 = vmatpush1.msra.mxu0 %v482
        %503 = vmatprep.subr.mxu0 0.0
        %504 = vmatpush1.msra.mxu0 %v483
        %505 = vmatprep.subr.mxu0 0.0
        %506 = vmatpush1.msra.mxu0 %v484
        %507 = vmatprep.subr.mxu0 0.0
        %508 = vmatpush1.msra.mxu0 %v485
        %509 = vmatprep.subr.mxu0 0.0
        %510 = vmatpush1.msra.mxu0 %v486
        %511 = vmatprep.subr.mxu0 0.0
        %512 = vmatpush1.msra.mxu0 %v487
        %513 = vmatprep.subr.mxu0 0.0
        %514 = vmatpush1.msra.mxu0 %v488
        %515 = vmatprep.subr.mxu0 0.0
        %516 = vmatpush1.msra.mxu0 %v489
        %517 = vmatprep.subr.mxu0 0.0
        %518 = vmatpush1.msra.mxu0 %v490
        %519 = vmatprep.subr.mxu0 0.0
        %520 = vmatpush1.msra.mxu0 %v491
        %521 = vmatprep.subr.mxu0 0.0
        %522 = vmatpush1.msra.mxu0 %v492
        %523 = vmatprep.subr.mxu0 0.0
        %524 = vmatpush1.msra.mxu0 %v493
        %525 = vmatprep.subr.mxu0 0.0
        %526 = vmatpush1.msra.mxu0 %v494
        %527 = vmatprep.subr.mxu0 0.0
        %528 = vmatpush1.msra.mxu0 0.0
        %529 = vmatprep.subr.mxu0 0.0
        %530 = vmatpush1.msra.mxu0 0.0
        %531 = vmatprep.subr.mxu0 0.0
        %532 = vmatpush1.msra.mxu0 0.0
        %533 = vmatprep.subr.mxu0 0.0
        %534 = vmatpush1.msra.mxu0 0.0
        %535 = vmatprep.subr.mxu0 0.0
        %536 = vmatpush1.msra.mxu0 0.0
        %537 = vmatprep.subr.mxu0 0.0
        %538 = vmatpush1.msra.mxu0 0.0
        %539 = vmatprep.subr.mxu0 0.0
        %540 = vmatpush1.msra.mxu0 0.0
        %541 = vmatprep.subr.mxu0 0.0
        %542 = vmatpush1.msra.mxu0 0.0
        %543 = vmatprep.subr.mxu0 0.0
        %544 = vmatpush1.msra.mxu0 0.0
        %545 = vmatprep.subr.mxu0 0.0
        %546 = vmatpush1.msra.mxu0 0.0
        %547 = vmatprep.subr.mxu0 0.0
        %548 = vmatpush1.msra.mxu0 0.0
        %549 = vmatprep.subr.mxu0 0.0
        %550 = vmatpush1.msra.mxu0 0.0
        %551 = vmatprep.subr.mxu0 0.0
        %552 = vmatpush1.msra.mxu0 0.0
        %553 = vmatprep.subr.mxu0 0.0
        %554 = vmatpush1.msra.mxu0 0.0
        %555 = vmatprep.subr.mxu0 0.0
        %556 = vmatpush1.msra.mxu0 0.0
        %557 = vmatprep.subr.mxu0 0.0
        %558 = vmatpush1.msra.mxu0 0.0
        %559 = vmatprep.mubr.f32.mxu0 0.0
        %560 = vmatmul.mubr.f32.gmra.mrb[0].mxu0 %v462
        %v561 = vpop.f32.mrb[0].mxu0
        %v562 = vadd.f32 0.0, %v561
        %v563 = vpop.f32.mrb[0].mxu0
        %564 = vmatprep.mubr.f32.mxu0 0.0
        %565 = vmatmul.mubr.f32.gmra.mrb[0].mxu0 %v469
        %v566 = vpop.f32.mrb[0].mxu0
        %v567 = vadd.f32 0.0, %v566
        %v568 = vpop.f32.mrb[0].mxu0
        %569 = vdwg.mxu0
        %v570 = vmul.f32 %v223, %v473
        %v571 = vmul.f32 %v223, %v475
        %v572 = vmul.f32 %v471, %v462
        %v573 = vmul.f32 %v570, %v469
        %v574 = vsub.f32 %v572, %v573
        %v575 = vmul.f32 %v571, %v562
        %v576 = vadd.f32 %v574, %v575
        %v577 = vmul.f32 %v477, %v567
        %v578 = vsub.f32 %v576, %v577
        %v579 = vmul.f32 %v471, %v469
        %v580 = vmul.f32 %v570, %v462
        %v581 = vadd.f32 %v579, %v580
        %v582 = vmul.f32 %v571, %v567
        %v583 = vadd.f32 %v581, %v582
        %v584 = vmul.f32 %v477, %v562
        %v585 = vadd.f32 %v583, %v584
        %s586 = scalar_lea.vmem %s206, 96
        %v587 = vld [vmem:[%s586] sm:$0xff]
        %s588 = scalar_lea.vmem %s206, 104
        %v589 = vld [vmem:[%s588] sm:$0xff]
        %s590 = scalar_lea.vmem %s206, 112
        %v591 = vld [vmem:[%s590] sm:$0xff]
        %s592 = scalar_lea.vmem %s206, 120
        %v593 = vld [vmem:[%s592] sm:$0xff]
        %s594 = scalar_lea.vmem %s3, 384
        %v595 = vld [vmem:[%s594] sm:$0xff]
        %v596 = vld [vmem:[%s594 + $0x8] sm:$0xff]
        %v597 = vld [vmem:[%s594 + $0x10] sm:$0xff]
        %v598 = vld [vmem:[%s594 + $0x18] sm:$0xff]
        %v599 = vld [vmem:[%s594 + $0x20] sm:$0xff]
        %v600 = vld [vmem:[%s594 + $0x28] sm:$0xff]
        %v601 = vld [vmem:[%s594 + $0x30] sm:$0xff]
        %v602 = vld [vmem:[%s594 + $0x38] sm:$0xff]
        %v603 = vld [vmem:[%s594 + $0x40] sm:$0xff]
        %v604 = vld [vmem:[%s594 + $0x48] sm:$0xff]
        %v605 = vld [vmem:[%s594 + $0x50] sm:$0xff]
        %v606 = vld [vmem:[%s594 + $0x58] sm:$0xff]
        %v607 = vld [vmem:[%s594 + $0x60] sm:$0xff]
        %v608 = vld [vmem:[%s594 + $0x68] sm:$0xff]
        %v609 = vld [vmem:[%s594 + $0x70] sm:$0xff]
        %v610 = vld [vmem:[%s594 + $0x78] sm:$0xff]
        %611 = vmatprep.subr.mxu0 0.0
        %612 = vmatpush1.msra.mxu0 %v595
        %613 = vmatprep.subr.mxu0 0.0
        %614 = vmatpush1.msra.mxu0 %v596
        %615 = vmatprep.subr.mxu0 0.0
        %616 = vmatpush1.msra.mxu0 %v597
        %617 = vmatprep.subr.mxu0 0.0
        %618 = vmatpush1.msra.mxu0 %v598
        %619 = vmatprep.subr.mxu0 0.0
        %620 = vmatpush1.msra.mxu0 %v599
        %621 = vmatprep.subr.mxu0 0.0
        %622 = vmatpush1.msra.mxu0 %v600
        %623 = vmatprep.subr.mxu0 0.0
        %624 = vmatpush1.msra.mxu0 %v601
        %625 = vmatprep.subr.mxu0 0.0
        %626 = vmatpush1.msra.mxu0 %v602
        %627 = vmatprep.subr.mxu0 0.0
        %628 = vmatpush1.msra.mxu0 %v603
        %629 = vmatprep.subr.mxu0 0.0
        %630 = vmatpush1.msra.mxu0 %v604
        %631 = vmatprep.subr.mxu0 0.0
        %632 = vmatpush1.msra.mxu0 %v605
        %633 = vmatprep.subr.mxu0 0.0
        %634 = vmatpush1.msra.mxu0 %v606
        %635 = vmatprep.subr.mxu0 0.0
        %636 = vmatpush1.msra.mxu0 %v607
        %637 = vmatprep.subr.mxu0 0.0
        %638 = vmatpush1.msra.mxu0 %v608
        %639 = vmatprep.subr.mxu0 0.0
        %640 = vmatpush1.msra.mxu0 %v609
        %641 = vmatprep.subr.mxu0 0.0
        %642 = vmatpush1.msra.mxu0 %v610
        %643 = vmatprep.subr.mxu0 0.0
        %644 = vmatpush1.msra.mxu0 0.0
        %645 = vmatprep.subr.mxu0 0.0
        %646 = vmatpush1.msra.mxu0 0.0
        %647 = vmatprep.subr.mxu0 0.0
        %648 = vmatpush1.msra.mxu0 0.0
        %649 = vmatprep.subr.mxu0 0.0
        %650 = vmatpush1.msra.mxu0 0.0
        %651 = vmatprep.subr.mxu0 0.0
        %652 = vmatpush1.msra.mxu0 0.0
        %653 = vmatprep.subr.mxu0 0.0
        %654 = vmatpush1.msra.mxu0 0.0
        %655 = vmatprep.subr.mxu0 0.0
        %656 = vmatpush1.msra.mxu0 0.0
        %657 = vmatprep.subr.mxu0 0.0
        %658 = vmatpush1.msra.mxu0 0.0
        %659 = vmatprep.subr.mxu0 0.0
        %660 = vmatpush1.msra.mxu0 0.0
        %661 = vmatprep.subr.mxu0 0.0
        %662 = vmatpush1.msra.mxu0 0.0
        %663 = vmatprep.subr.mxu0 0.0
        %664 = vmatpush1.msra.mxu0 0.0
        %665 = vmatprep.subr.mxu0 0.0
        %666 = vmatpush1.msra.mxu0 0.0
        %667 = vmatprep.subr.mxu0 0.0
        %668 = vmatpush1.msra.mxu0 0.0
        %669 = vmatprep.subr.mxu0 0.0
        %670 = vmatpush1.msra.mxu0 0.0
        %671 = vmatprep.subr.mxu0 0.0
        %672 = vmatpush1.msra.mxu0 0.0
        %673 = vmatprep.subr.mxu0 0.0
        %674 = vmatpush1.msra.mxu0 0.0
        %675 = vmatprep.mubr.f32.mxu0 0.0
        %676 = vmatmul.mubr.f32.gmra.mrb[0].mxu0 %v578
        %v677 = vpop.f32.mrb[0].mxu0
        %v678 = vadd.f32 0.0, %v677
        %v679 = vpop.f32.mrb[0].mxu0
        %680 = vmatprep.mubr.f32.mxu0 0.0
        %681 = vmatmul.mubr.f32.gmra.mrb[0].mxu0 %v585
        %v682 = vpop.f32.mrb[0].mxu0
        %v683 = vadd.f32 0.0, %v682
        %v684 = vpop.f32.mrb[0].mxu0
        %685 = vdwg.mxu0
        %v686 = vmul.f32 %v226, %v589
        %v687 = vmul.f32 %v226, %v591
        %v688 = vmul.f32 %v587, %v578
        %v689 = vmul.f32 %v686, %v585
        %v690 = vsub.f32 %v688, %v689
        %v691 = vmul.f32 %v687, %v678
        %v692 = vadd.f32 %v690, %v691
        %v693 = vmul.f32 %v593, %v683
        %v694 = vsub.f32 %v692, %v693
        %v695 = vmul.f32 %v587, %v585
        %v696 = vmul.f32 %v686, %v578
        %v697 = vadd.f32 %v695, %v696
        %v698 = vmul.f32 %v687, %v683
        %v699 = vadd.f32 %v697, %v698
        %v700 = vmul.f32 %v593, %v678
        %v701 = vadd.f32 %v699, %v700
        %v702 = vmul.f32 %v694, %v237
        %v703 = vmul.f32 %v701, %v237
        %s704 = scalar_lea.vmem %s206, 128
        %v705 = vld [vmem:[%s704] sm:$0xff]
        %s706 = scalar_lea.vmem %s206, 136
        %v707 = vld [vmem:[%s706] sm:$0xff]
        %s708 = scalar_lea.vmem %s206, 144
        %v709 = vld [vmem:[%s708] sm:$0xff]
        %s710 = scalar_lea.vmem %s206, 152
        %v711 = vld [vmem:[%s710] sm:$0xff]
        %712 = vmatprep.subr.mxu0 0.0
        %713 = vmatpush1.msra.mxu0 %v247
        %714 = vmatprep.subr.mxu0 0.0
        %715 = vmatpush1.msra.mxu0 %v248
        %716 = vmatprep.subr.mxu0 0.0
        %717 = vmatpush1.msra.mxu0 %v249
        %718 = vmatprep.subr.mxu0 0.0
        %719 = vmatpush1.msra.mxu0 %v250
        %720 = vmatprep.subr.mxu0 0.0
        %721 = vmatpush1.msra.mxu0 %v251
        %722 = vmatprep.subr.mxu0 0.0
        %723 = vmatpush1.msra.mxu0 %v252
        %724 = vmatprep.subr.mxu0 0.0
        %725 = vmatpush1.msra.mxu0 %v253
        %726 = vmatprep.subr.mxu0 0.0
        %727 = vmatpush1.msra.mxu0 %v254
        %728 = vmatprep.subr.mxu0 0.0
        %729 = vmatpush1.msra.mxu0 %v255
        %730 = vmatprep.subr.mxu0 0.0
        %731 = vmatpush1.msra.mxu0 %v256
        %732 = vmatprep.subr.mxu0 0.0
        %733 = vmatpush1.msra.mxu0 %v257
        %734 = vmatprep.subr.mxu0 0.0
        %735 = vmatpush1.msra.mxu0 %v258
        %736 = vmatprep.subr.mxu0 0.0
        %737 = vmatpush1.msra.mxu0 %v259
        %738 = vmatprep.subr.mxu0 0.0
        %739 = vmatpush1.msra.mxu0 %v260
        %740 = vmatprep.subr.mxu0 0.0
        %741 = vmatpush1.msra.mxu0 %v261
        %742 = vmatprep.subr.mxu0 0.0
        %743 = vmatpush1.msra.mxu0 %v262
        %744 = vmatprep.subr.mxu0 0.0
        %745 = vmatpush1.msra.mxu0 0.0
        %746 = vmatprep.subr.mxu0 0.0
        %747 = vmatpush1.msra.mxu0 0.0
        %748 = vmatprep.subr.mxu0 0.0
        %749 = vmatpush1.msra.mxu0 0.0
        %750 = vmatprep.subr.mxu0 0.0
        %751 = vmatpush1.msra.mxu0 0.0
        %752 = vmatprep.subr.mxu0 0.0
        %753 = vmatpush1.msra.mxu0 0.0
        %754 = vmatprep.subr.mxu0 0.0
        %755 = vmatpush1.msra.mxu0 0.0
        %756 = vmatprep.subr.mxu0 0.0
        %757 = vmatpush1.msra.mxu0 0.0
        %758 = vmatprep.subr.mxu0 0.0
        %759 = vmatpush1.msra.mxu0 0.0
        %760 = vmatprep.subr.mxu0 0.0
        %761 = vmatpush1.msra.mxu0 0.0
        %762 = vmatprep.subr.mxu0 0.0
        %763 = vmatpush1.msra.mxu0 0.0
        %764 = vmatprep.subr.mxu0 0.0
        %765 = vmatpush1.msra.mxu0 0.0
        %766 = vmatprep.subr.mxu0 0.0
        %767 = vmatpush1.msra.mxu0 0.0
        %768 = vmatprep.subr.mxu0 0.0
        %769 = vmatpush1.msra.mxu0 0.0
        %770 = vmatprep.subr.mxu0 0.0
        %771 = vmatpush1.msra.mxu0 0.0
        %772 = vmatprep.subr.mxu0 0.0
        %773 = vmatpush1.msra.mxu0 0.0
        %774 = vmatprep.subr.mxu0 0.0
        %775 = vmatpush1.msra.mxu0 0.0
        %776 = vmatprep.mubr.f32.mxu0 0.0
        %777 = vmatmul.mubr.f32.gmra.mrb[0].mxu0 %v702
        %v778 = vpop.f32.mrb[0].mxu0
        %v779 = vadd.f32 0.0, %v778
        %v780 = vpop.f32.mrb[0].mxu0
        %781 = vmatprep.mubr.f32.mxu0 0.0
        %782 = vmatmul.mubr.f32.gmra.mrb[0].mxu0 %v703
        %v783 = vpop.f32.mrb[0].mxu0
        %v784 = vadd.f32 0.0, %v783
        %v785 = vpop.f32.mrb[0].mxu0
        %786 = vdwg.mxu0
        %v787 = vmul.f32 %v217, %v707
        %v788 = vmul.f32 %v217, %v709
        %v789 = vmul.f32 %v705, %v702
        %v790 = vmul.f32 %v787, %v703
        %v791 = vsub.f32 %v789, %v790
        %v792 = vmul.f32 %v788, %v779
        %v793 = vadd.f32 %v791, %v792
        %v794 = vmul.f32 %v711, %v784
        %v795 = vsub.f32 %v793, %v794
        %v796 = vmul.f32 %v705, %v703
        %v797 = vmul.f32 %v787, %v702
        %v798 = vadd.f32 %v796, %v797
        %v799 = vmul.f32 %v788, %v784
        %v800 = vadd.f32 %v798, %v799
        %v801 = vmul.f32 %v711, %v779
        %v802 = vadd.f32 %v800, %v801
        %s803 = scalar_lea.vmem %s206, 160
        %v804 = vld [vmem:[%s803] sm:$0xff]
        %s805 = scalar_lea.vmem %s206, 168
        %v806 = vld [vmem:[%s805] sm:$0xff]
        %s807 = scalar_lea.vmem %s206, 176
        %v808 = vld [vmem:[%s807] sm:$0xff]
        %s809 = scalar_lea.vmem %s206, 184
        %v810 = vld [vmem:[%s809] sm:$0xff]
        %811 = vmatprep.subr.mxu0 0.0
        %812 = vmatpush1.msra.mxu0 %v363
        %813 = vmatprep.subr.mxu0 0.0
        %814 = vmatpush1.msra.mxu0 %v364
        %815 = vmatprep.subr.mxu0 0.0
        %816 = vmatpush1.msra.mxu0 %v365
        %817 = vmatprep.subr.mxu0 0.0
        %818 = vmatpush1.msra.mxu0 %v366
        %819 = vmatprep.subr.mxu0 0.0
        %820 = vmatpush1.msra.mxu0 %v367
        %821 = vmatprep.subr.mxu0 0.0
        %822 = vmatpush1.msra.mxu0 %v368
        %823 = vmatprep.subr.mxu0 0.0
        %824 = vmatpush1.msra.mxu0 %v369
        %825 = vmatprep.subr.mxu0 0.0
        %826 = vmatpush1.msra.mxu0 %v370
        %827 = vmatprep.subr.mxu0 0.0
        %828 = vmatpush1.msra.mxu0 %v371
        %829 = vmatprep.subr.mxu0 0.0
        %830 = vmatpush1.msra.mxu0 %v372
        %831 = vmatprep.subr.mxu0 0.0
        %832 = vmatpush1.msra.mxu0 %v373
        %833 = vmatprep.subr.mxu0 0.0
        %834 = vmatpush1.msra.mxu0 %v374
        %835 = vmatprep.subr.mxu0 0.0
        %836 = vmatpush1.msra.mxu0 %v375
        %837 = vmatprep.subr.mxu0 0.0
        %838 = vmatpush1.msra.mxu0 %v376
        %839 = vmatprep.subr.mxu0 0.0
        %840 = vmatpush1.msra.mxu0 %v377
        %841 = vmatprep.subr.mxu0 0.0
        %842 = vmatpush1.msra.mxu0 %v378
        %843 = vmatprep.subr.mxu0 0.0
        %844 = vmatpush1.msra.mxu0 0.0
        %845 = vmatprep.subr.mxu0 0.0
        %846 = vmatpush1.msra.mxu0 0.0
        %847 = vmatprep.subr.mxu0 0.0
        %848 = vmatpush1.msra.mxu0 0.0
        %849 = vmatprep.subr.mxu0 0.0
        %850 = vmatpush1.msra.mxu0 0.0
        %851 = vmatprep.subr.mxu0 0.0
        %852 = vmatpush1.msra.mxu0 0.0
        %853 = vmatprep.subr.mxu0 0.0
        %854 = vmatpush1.msra.mxu0 0.0
        %855 = vmatprep.subr.mxu0 0.0
        %856 = vmatpush1.msra.mxu0 0.0
        %857 = vmatprep.subr.mxu0 0.0
        %858 = vmatpush1.msra.mxu0 0.0
        %859 = vmatprep.subr.mxu0 0.0
        %860 = vmatpush1.msra.mxu0 0.0
        %861 = vmatprep.subr.mxu0 0.0
        %862 = vmatpush1.msra.mxu0 0.0
        %863 = vmatprep.subr.mxu0 0.0
        %864 = vmatpush1.msra.mxu0 0.0
        %865 = vmatprep.subr.mxu0 0.0
        %866 = vmatpush1.msra.mxu0 0.0
        %867 = vmatprep.subr.mxu0 0.0
        %868 = vmatpush1.msra.mxu0 0.0
        %869 = vmatprep.subr.mxu0 0.0
        %870 = vmatpush1.msra.mxu0 0.0
        %871 = vmatprep.subr.mxu0 0.0
        %872 = vmatpush1.msra.mxu0 0.0
        %873 = vmatprep.subr.mxu0 0.0
        %874 = vmatpush1.msra.mxu0 0.0
        %875 = vmatprep.mubr.f32.mxu0 0.0
        %876 = vmatmul.mubr.f32.gmra.mrb[0].mxu0 %v795
        %v877 = vpop.f32.mrb[0].mxu0
        %v878 = vadd.f32 0.0, %v877
        %v879 = vpop.f32.mrb[0].mxu0
        %880 = vmatprep.mubr.f32.mxu0 0.0
        %881 = vmatmul.mubr.f32.gmra.mrb[0].mxu0 %v802
        %v882 = vpop.f32.mrb[0].mxu0
        %v883 = vadd.f32 0.0, %v882
        %v884 = vpop.f32.mrb[0].mxu0
        %885 = vdwg.mxu0
        %v886 = vmul.f32 %v220, %v806
        %v887 = vmul.f32 %v220, %v808
        %v888 = vmul.f32 %v804, %v795
        %v889 = vmul.f32 %v886, %v802
        %v890 = vsub.f32 %v888, %v889
        %v891 = vmul.f32 %v887, %v878
        %v892 = vadd.f32 %v890, %v891
        %v893 = vmul.f32 %v810, %v883
        %v894 = vsub.f32 %v892, %v893
        %v895 = vmul.f32 %v804, %v802
        %v896 = vmul.f32 %v886, %v795
        %v897 = vadd.f32 %v895, %v896
        %v898 = vmul.f32 %v887, %v883
        %v899 = vadd.f32 %v897, %v898
        %v900 = vmul.f32 %v810, %v878
        %v901 = vadd.f32 %v899, %v900
        %s902 = scalar_lea.vmem %s206, 192
        %v903 = vld [vmem:[%s902] sm:$0xff]
        %s904 = scalar_lea.vmem %s206, 200
        %v905 = vld [vmem:[%s904] sm:$0xff]
        %s906 = scalar_lea.vmem %s206, 208
        %v907 = vld [vmem:[%s906] sm:$0xff]
        %s908 = scalar_lea.vmem %s206, 216
        %v909 = vld [vmem:[%s908] sm:$0xff]
        %910 = vmatprep.subr.mxu0 0.0
        %911 = vmatpush1.msra.mxu0 %v479
        %912 = vmatprep.subr.mxu0 0.0
        %913 = vmatpush1.msra.mxu0 %v480
        %914 = vmatprep.subr.mxu0 0.0
        %915 = vmatpush1.msra.mxu0 %v481
        %916 = vmatprep.subr.mxu0 0.0
        %917 = vmatpush1.msra.mxu0 %v482
        %918 = vmatprep.subr.mxu0 0.0
        %919 = vmatpush1.msra.mxu0 %v483
        %920 = vmatprep.subr.mxu0 0.0
        %921 = vmatpush1.msra.mxu0 %v484
        %922 = vmatprep.subr.mxu0 0.0
        %923 = vmatpush1.msra.mxu0 %v485
        %924 = vmatprep.subr.mxu0 0.0
        %925 = vmatpush1.msra.mxu0 %v486
        %926 = vmatprep.subr.mxu0 0.0
        %927 = vmatpush1.msra.mxu0 %v487
        %928 = vmatprep.subr.mxu0 0.0
        %929 = vmatpush1.msra.mxu0 %v488
        %930 = vmatprep.subr.mxu0 0.0
        %931 = vmatpush1.msra.mxu0 %v489
        %932 = vmatprep.subr.mxu0 0.0
        %933 = vmatpush1.msra.mxu0 %v490
        %934 = vmatprep.subr.mxu0 0.0
        %935 = vmatpush1.msra.mxu0 %v491
        %936 = vmatprep.subr.mxu0 0.0
        %937 = vmatpush1.msra.mxu0 %v492
        %938 = vmatprep.subr.mxu0 0.0
        %939 = vmatpush1.msra.mxu0 %v493
        %940 = vmatprep.subr.mxu0 0.0
        %941 = vmatpush1.msra.mxu0 %v494
        %942 = vmatprep.subr.mxu0 0.0
        %943 = vmatpush1.msra.mxu0 0.0
        %944 = vmatprep.subr.mxu0 0.0
        %945 = vmatpush1.msra.mxu0 0.0
        %946 = vmatprep.subr.mxu0 0.0
        %947 = vmatpush1.msra.mxu0 0.0
        %948 = vmatprep.subr.mxu0 0.0
        %949 = vmatpush1.msra.mxu0 0.0
        %950 = vmatprep.subr.mxu0 0.0
        %951 = vmatpush1.msra.mxu0 0.0
        %952 = vmatprep.subr.mxu0 0.0
        %953 = vmatpush1.msra.mxu0 0.0
        %954 = vmatprep.subr.mxu0 0.0
        %955 = vmatpush1.msra.mxu0 0.0
        %956 = vmatprep.subr.mxu0 0.0
        %957 = vmatpush1.msra.mxu0 0.0
        %958 = vmatprep.subr.mxu0 0.0
        %959 = vmatpush1.msra.mxu0 0.0
        %960 = vmatprep.subr.mxu0 0.0
        %961 = vmatpush1.msra.mxu0 0.0
        %962 = vmatprep.subr.mxu0 0.0
        %963 = vmatpush1.msra.mxu0 0.0
        %964 = vmatprep.subr.mxu0 0.0
        %965 = vmatpush1.msra.mxu0 0.0
        %966 = vmatprep.subr.mxu0 0.0
        %967 = vmatpush1.msra.mxu0 0.0
        %968 = vmatprep.subr.mxu0 0.0
        %969 = vmatpush1.msra.mxu0 0.0
        %970 = vmatprep.subr.mxu0 0.0
        %971 = vmatpush1.msra.mxu0 0.0
        %972 = vmatprep.subr.mxu0 0.0
        %973 = vmatpush1.msra.mxu0 0.0
        %974 = vmatprep.mubr.f32.mxu0 0.0
        %975 = vmatmul.mubr.f32.gmra.mrb[0].mxu0 %v894
        %v976 = vpop.f32.mrb[0].mxu0
        %v977 = vadd.f32 0.0, %v976
        %v978 = vpop.f32.mrb[0].mxu0
        %979 = vmatprep.mubr.f32.mxu0 0.0
        %980 = vmatmul.mubr.f32.gmra.mrb[0].mxu0 %v901
        %v981 = vpop.f32.mrb[0].mxu0
        %v982 = vadd.f32 0.0, %v981
        %v983 = vpop.f32.mrb[0].mxu0
        %984 = vdwg.mxu0
        %v985 = vmul.f32 %v223, %v905
        %v986 = vmul.f32 %v223, %v907
        %v987 = vmul.f32 %v903, %v894
        %v988 = vmul.f32 %v985, %v901
        %v989 = vsub.f32 %v987, %v988
        %v990 = vmul.f32 %v986, %v977
        %v991 = vadd.f32 %v989, %v990
        %v992 = vmul.f32 %v909, %v982
        %v993 = vsub.f32 %v991, %v992
        %v994 = vmul.f32 %v903, %v901
        %v995 = vmul.f32 %v985, %v894
        %v996 = vadd.f32 %v994, %v995
        %v997 = vmul.f32 %v986, %v982
        %v998 = vadd.f32 %v996, %v997
        %v999 = vmul.f32 %v909, %v977
        %v1000 = vadd.f32 %v998, %v999
        %s1001 = scalar_lea.vmem %s206, 224
        %v1002 = vld [vmem:[%s1001] sm:$0xff]
        %s1003 = scalar_lea.vmem %s206, 232
        %v1004 = vld [vmem:[%s1003] sm:$0xff]
        %s1005 = scalar_lea.vmem %s206, 240
        %v1006 = vld [vmem:[%s1005] sm:$0xff]
        %s1007 = scalar_lea.vmem %s206, 248
        %v1008 = vld [vmem:[%s1007] sm:$0xff]
        %1009 = vmatprep.subr.mxu0 0.0
        %1010 = vmatpush1.msra.mxu0 %v595
        %1011 = vmatprep.subr.mxu0 0.0
        %1012 = vmatpush1.msra.mxu0 %v596
        %1013 = vmatprep.subr.mxu0 0.0
        %1014 = vmatpush1.msra.mxu0 %v597
        %1015 = vmatprep.subr.mxu0 0.0
        %1016 = vmatpush1.msra.mxu0 %v598
        %1017 = vmatprep.subr.mxu0 0.0
        %1018 = vmatpush1.msra.mxu0 %v599
        %1019 = vmatprep.subr.mxu0 0.0
        %1020 = vmatpush1.msra.mxu0 %v600
        %1021 = vmatprep.subr.mxu0 0.0
        %1022 = vmatpush1.msra.mxu0 %v601
        %1023 = vmatprep.subr.mxu0 0.0
        %1024 = vmatpush1.msra.mxu0 %v602
        %1025 = vmatprep.subr.mxu0 0.0
        %1026 = vmatpush1.msra.mxu0 %v603
        %1027 = vmatprep.subr.mxu0 0.0
        %1028 = vmatpush1.msra.mxu0 %v604
        %1029 = vmatprep.subr.mxu0 0.0
        %1030 = vmatpush1.msra.mxu0 %v605
        %1031 = vmatprep.subr.mxu0 0.0
        %1032 = vmatpush1.msra.mxu0 %v606
        %1033 = vmatprep.subr.mxu0 0.0
        %1034 = vmatpush1.msra.mxu0 %v607
        %1035 = vmatprep.subr.mxu0 0.0
        %1036 = vmatpush1.msra.mxu0 %v608
        %1037 = vmatprep.subr.mxu0 0.0
        %1038 = vmatpush1.msra.mxu0 %v609
        %1039 = vmatprep.subr.mxu0 0.0
        %1040 = vmatpush1.msra.mxu0 %v610
        %1041 = vmatprep.subr.mxu0 0.0
        %1042 = vmatpush1.msra.mxu0 0.0
        %1043 = vmatprep.subr.mxu0 0.0
        %1044 = vmatpush1.msra.mxu0 0.0
        %1045 = vmatprep.subr.mxu0 0.0
        %1046 = vmatpush1.msra.mxu0 0.0
        %1047 = vmatprep.subr.mxu0 0.0
        %1048 = vmatpush1.msra.mxu0 0.0
        %1049 = vmatprep.subr.mxu0 0.0
        %1050 = vmatpush1.msra.mxu0 0.0
        %1051 = vmatprep.subr.mxu0 0.0
        %1052 = vmatpush1.msra.mxu0 0.0
        %1053 = vmatprep.subr.mxu0 0.0
        %1054 = vmatpush1.msra.mxu0 0.0
        %1055 = vmatprep.subr.mxu0 0.0
        %1056 = vmatpush1.msra.mxu0 0.0
        %1057 = vmatprep.subr.mxu0 0.0
        %1058 = vmatpush1.msra.mxu0 0.0
        %1059 = vmatprep.subr.mxu0 0.0
        %1060 = vmatpush1.msra.mxu0 0.0
        %1061 = vmatprep.subr.mxu0 0.0
        %1062 = vmatpush1.msra.mxu0 0.0
        %1063 = vmatprep.subr.mxu0 0.0
        %1064 = vmatpush1.msra.mxu0 0.0
        %1065 = vmatprep.subr.mxu0 0.0
        %1066 = vmatpush1.msra.mxu0 0.0
        %1067 = vmatprep.subr.mxu0 0.0
        %1068 = vmatpush1.msra.mxu0 0.0
        %1069 = vmatprep.subr.mxu0 0.0
        %1070 = vmatpush1.msra.mxu0 0.0
        %1071 = vmatprep.subr.mxu0 0.0
        %1072 = vmatpush1.msra.mxu0 0.0
        %1073 = vmatprep.mubr.f32.mxu0 0.0
        %1074 = vmatmul.mubr.f32.gmra.mrb[0].mxu0 %v993
        %v1075 = vpop.f32.mrb[0].mxu0
        %v1076 = vadd.f32 0.0, %v1075
        %v1077 = vpop.f32.mrb[0].mxu0
        %1078 = vmatprep.mubr.f32.mxu0 0.0
        %1079 = vmatmul.mubr.f32.gmra.mrb[0].mxu0 %v1000
        %v1080 = vpop.f32.mrb[0].mxu0
        %v1081 = vadd.f32 0.0, %v1080
        %v1082 = vpop.f32.mrb[0].mxu0
        %1083 = vdwg.mxu0
        %v1084 = vmul.f32 %v226, %v1004
        %v1085 = vmul.f32 %v226, %v1006
        %v1086 = vmul.f32 %v1002, %v993
        %v1087 = vmul.f32 %v1084, %v1000
        %v1088 = vsub.f32 %v1086, %v1087
        %v1089 = vmul.f32 %v1085, %v1076
        %v1090 = vadd.f32 %v1088, %v1089
        %v1091 = vmul.f32 %v1008, %v1081
        %v1092 = vsub.f32 %v1090, %v1091
        %v1093 = vmul.f32 %v1002, %v1000
        %v1094 = vmul.f32 %v1084, %v993
        %v1095 = vadd.f32 %v1093, %v1094
        %v1096 = vmul.f32 %v1085, %v1081
        %v1097 = vadd.f32 %v1095, %v1096
        %v1098 = vmul.f32 %v1008, %v1076
        %v1099 = vadd.f32 %v1097, %v1098
        %v1100 = vmul.f32 %v1092, %v237
        %v1101 = vmul.f32 %v1099, %v237
        %v1102 = vmul.f32 %v1100, %v1100
        %v1103 = vmul.f32 %v1101, %v1101
        %v1104 = vadd.f32 %v1102, %v1103
        %v1105 = vld [vmem:[%s1] sm:$0xff]
        %v1106 = vld [vmem:[%s1 + $0x8] sm:$0xff]
        %v1107 = vld [vmem:[%s1 + $0x10] sm:$0xff]
        %v1108 = vld [vmem:[%s1 + $0x18] sm:$0xff]
        %v1109 = vld [vmem:[%s1 + $0x20] sm:$0xff]
        %v1110 = vld [vmem:[%s1 + $0x28] sm:$0xff]
        %v1111 = vld [vmem:[%s1 + $0x30] sm:$0xff]
        %v1112 = vld [vmem:[%s1 + $0x38] sm:$0xff]
        %v1113 = vld [vmem:[%s1 + $0x40] sm:$0xff]
        %v1114 = vld [vmem:[%s1 + $0x48] sm:$0xff]
        %v1115 = vld [vmem:[%s1 + $0x50] sm:$0xff]
        %v1116 = vld [vmem:[%s1 + $0x58] sm:$0xff]
        %v1117 = vld [vmem:[%s1 + $0x60] sm:$0xff]
        %v1118 = vld [vmem:[%s1 + $0x68] sm:$0xff]
        %v1119 = vld [vmem:[%s1 + $0x70] sm:$0xff]
        %v1120 = vld [vmem:[%s1 + $0x78] sm:$0xff]
        %v1121 = vand.u32 %v213, 1
        %vm1122 = vcmp.eq.s32.totalorder %v1121, 0
        %s1123 = sld [smem:[#allocation2]]
        %s1124 = sld [smem:[#allocation2 + $0x1]]
        %v1125 = vstv %s1123
        %v1126 = vstv %s1124
        %v1127 = vsel %vm1122, %v1125, %v1126
        %1128 = vmatprep.subr.mxu0 0.0
        %1129 = vmatpush1.msra.mxu0 %v1105
        %1130 = vmatprep.subr.mxu0 0.0
        %1131 = vmatpush1.msra.mxu0 %v1106
        %1132 = vmatprep.subr.mxu0 0.0
        %1133 = vmatpush1.msra.mxu0 %v1107
        %1134 = vmatprep.subr.mxu0 0.0
        %1135 = vmatpush1.msra.mxu0 %v1108
        %1136 = vmatprep.subr.mxu0 0.0
        %1137 = vmatpush1.msra.mxu0 %v1109
        %1138 = vmatprep.subr.mxu0 0.0
        %1139 = vmatpush1.msra.mxu0 %v1110
        %1140 = vmatprep.subr.mxu0 0.0
        %1141 = vmatpush1.msra.mxu0 %v1111
        %1142 = vmatprep.subr.mxu0 0.0
        %1143 = vmatpush1.msra.mxu0 %v1112
        %1144 = vmatprep.subr.mxu0 0.0
        %1145 = vmatpush1.msra.mxu0 %v1113
        %1146 = vmatprep.subr.mxu0 0.0
        %1147 = vmatpush1.msra.mxu0 %v1114
        %1148 = vmatprep.subr.mxu0 0.0
        %1149 = vmatpush1.msra.mxu0 %v1115
        %1150 = vmatprep.subr.mxu0 0.0
        %1151 = vmatpush1.msra.mxu0 %v1116
        %1152 = vmatprep.subr.mxu0 0.0
        %1153 = vmatpush1.msra.mxu0 %v1117
        %1154 = vmatprep.subr.mxu0 0.0
        %1155 = vmatpush1.msra.mxu0 %v1118
        %1156 = vmatprep.subr.mxu0 0.0
        %1157 = vmatpush1.msra.mxu0 %v1119
        %1158 = vmatprep.subr.mxu0 0.0
        %1159 = vmatpush1.msra.mxu0 %v1120
        %1160 = vmatprep.subr.mxu0 0.0
        %1161 = vmatpush1.msra.mxu0 0.0
        %1162 = vmatprep.subr.mxu0 0.0
        %1163 = vmatpush1.msra.mxu0 0.0
        %1164 = vmatprep.subr.mxu0 0.0
        %1165 = vmatpush1.msra.mxu0 0.0
        %1166 = vmatprep.subr.mxu0 0.0
        %1167 = vmatpush1.msra.mxu0 0.0
        %1168 = vmatprep.subr.mxu0 0.0
        %1169 = vmatpush1.msra.mxu0 0.0
        %1170 = vmatprep.subr.mxu0 0.0
        %1171 = vmatpush1.msra.mxu0 0.0
        %1172 = vmatprep.subr.mxu0 0.0
        %1173 = vmatpush1.msra.mxu0 0.0
        %1174 = vmatprep.subr.mxu0 0.0
        %1175 = vmatpush1.msra.mxu0 0.0
        %1176 = vmatprep.subr.mxu0 0.0
        %1177 = vmatpush1.msra.mxu0 0.0
        %1178 = vmatprep.subr.mxu0 0.0
        %1179 = vmatpush1.msra.mxu0 0.0
        %1180 = vmatprep.subr.mxu0 0.0
        %1181 = vmatpush1.msra.mxu0 0.0
        %1182 = vmatprep.subr.mxu0 0.0
        %1183 = vmatpush1.msra.mxu0 0.0
        %1184 = vmatprep.subr.mxu0 0.0
        %1185 = vmatpush1.msra.mxu0 0.0
        %1186 = vmatprep.subr.mxu0 0.0
        %1187 = vmatpush1.msra.mxu0 0.0
        %1188 = vmatprep.subr.mxu0 0.0
        %1189 = vmatpush1.msra.mxu0 0.0
        %1190 = vmatprep.subr.mxu0 0.0
        %1191 = vmatpush1.msra.mxu0 0.0
        %1192 = vmatprep.mubr.f32.mxu0 0.0
        %1193 = vmatmul.mubr.f32.gmra.mrb[0].mxu0 %v1104
        %v1194 = vpop.f32.mrb[0].mxu0
        %v1195 = vadd.f32 1.0, %v1194
        %v1196 = vpop.f32.mrb[0].mxu0
        %1197 = vdwg.mxu0
        %v1198 = vmul.f32 %v1195, 0.5
        %v1199 = vmul.f32 %v1198, %v1127
        %vm1200 = vcmask 130048
        %1201 = vst.msk [vmem:[%s211] sm:$0xff] %vm1200, %v1199
        %p1202 = scmp.lt.s32.totalorder %s16, 1
        %s1203 = scalar_select %p1202, %s16, 1
        %s1204 = smul.addr %s1203, 8
        %s1205 = scalar_lea.vmem %s4, %s1204
        // Predicated region
        $region41: #{forward.1} parent=35 // pred_check
          %p1206 = pneg %p123
        $region42: #{forward.1} parent=35 // pred_check_branch
          %1208 = sbr.rel (%p1206) target = $region44
        $region43: #{forward.1} parent=35 // pred_region
          _
        $region44: #{forward.1} parent=35 // pred_fallthru
          _
      $region36: #{forward.1} parent=5 // pred_fallthru
        _
      %p1209 = scmp.le.s32.totalorder 2, %s11
      // Predicated region
      $region45: #{forward.1} parent=5 // pred_check
        %p1210 = pneg %p1209
      $region46: #{forward.1} parent=5 // pred_check_branch
        %1212 = sbr.rel (%p1210) target = $region48
      $region47: #{forward.1} parent=5 // pred_region
        %s1213 = ssub.s32 %s11, 2
        // Predicated region
        $region49: #{forward.1} parent=47 // pred_check
          %p1214 = pneg %p129
        $region50: #{forward.1} parent=47 // pred_check_branch
          %1216 = sbr.rel (%p1214) target = $region52
        $region51: #{forward.1} parent=47 // pred_region
          %p1217 = scmp.lt.s32.totalorder %s17, 1
          %s1218 = scalar_select %p1217, %s17, 1
          %s1219 = smul.addr %s1218, 8
          %s1220 = scalar_lea.vmem %s4, %s1219
        $region52: #{forward.1} parent=47 // pred_fallthru
          _
      $region48: #{forward.1} parent=5 // pred_fallthru
        _
    $region6: #{forward.1} parent=1 // loop_footer
      %s15 = sadd.s32 1, %s11
    $region7: #{forward.1} parent=1 // loop_footer_branch
      %10 = sbr.rel target = $region3
    $region8: #{forward.1} parent=1 // loop_exit
      _
    %1221 = vsyncpa [#allocation3], 1
    %s1222 = scalar_lea.sflag [#allocation3], 1
    %1223 = vsyncpa %s1222, 1

</llo_original>
